<compile_context>
chip_gen: v5e
topology: v5e:2x2
jax: 0.10.0
libtpu: 0.0.40
codegen_flags: <defaults>
</compile_context>

<pallas_src>
import functools

import jax
import jax.numpy as jnp
from jax import lax
from jax.experimental import pallas as pl
from jax.experimental.pallas import tpu as pltpu


def _convlstm_cell_kernel(p_ref, c_ref, w_ref, wp_ref, o_ref, h_ref, cn_ref,
                          *, Chid, Bb):
    """One grid step processes Bb batch elements (Bb is 1 or 2, static).

    p_ref  : (Bb, Kp+1, HW)      f32  im2col patches of [x | h] + constant-1 bias row
    c_ref  : (Bb, Chid, HW)      f32  cell state
    w_ref  : (4*Chid, Kp+1)      f32  fused conv weights (+bias column), gates (i, f, o, c)
    wp_ref : (3*Chid, HW)        f32  peephole weights, gates (i, f, o)
    o_ref  : (Bb, Chid, HW)      f32  output gate
    h_ref  : (Bb, Chid, HW)      f32  new hidden state
    cn_ref : (Bb, Chid, HW)      f32  new cell state
    """
    w = w_ref[...]                     # (4*Chid, Kp+1), hoisted out of the batch loop
    wp = wp_ref[...]                   # (3*Chid, HW)
    wci = wp[0 * Chid:1 * Chid]        # sublane-range views, tile-aligned (Chid=32)
    wcf = wp[1 * Chid:2 * Chid]
    wco = wp[2 * Chid:3 * Chid]

    for b in range(Bb):                # static unroll (Bb in {1, 2})
        # All 8 convolutions + bias as a single MXU GEMM, f32 accumulation.
        acc = jnp.dot(w, p_ref[b], preferred_element_type=jnp.float32)   # (4*Chid, HW)
        c = c_ref[b]                                                     # (Chid, HW)

        # Per-gate sublane slices of the accumulator; peephole adds use the OLD c,
        # exactly as in the PyTorch module (including the output gate).
        ig = jax.nn.sigmoid(acc[0 * Chid:1 * Chid] + wci * c)
        fg = jax.nn.sigmoid(acc[1 * Chid:2 * Chid] + wcf * c)
        og = jax.nn.sigmoid(acc[2 * Chid:3 * Chid] + wco * c)
        g = jnp.tanh(acc[3 * Chid:4 * Chid])

        c_new = fg * c + ig * g
        h_new = og * c_new

        # Lane-dense (Chid=32 sublanes, HW=256 lanes) unmasked stores.
        o_ref[b] = og.astype(o_ref.dtype)
        h_ref[b] = h_new.astype(h_ref.dtype)
        cn_ref[b] = c_new.astype(cn_ref.dtype)


def _default_batch_splits(B):
    """2-way parallel grid on 2-TensorCore chips (v7x); 1 grid step elsewhere."""
    try:
        kind = jax.devices()[0].device_kind.lower()
    except Exception:
        kind = ""
    if "v7" in kind and B % 2 == 0:
        return 2
    return 1


def conv_lstm_forward(x_nchw, h_nchw, c_nchw, params, kernel_size, *, batch_splits=None):
    """Matches ConvLSTM.forward: returns (output, h_new, c_new), all NCHW."""
    B, Cin, H, W = x_nchw.shape
    K = kernel_size
    pad = K // 2
    Chid = params["wp"].shape[0] // 3
    HW = H * W
    Kp = K * K * (Cin + Chid)
    Kp1 = Kp + 1                       # + constant-1 row for the folded bias

    dtype = jnp.float32

    # NCHW is kept end-to-end (no transposes): fuse x/h along channels, pad,
    # im2col along the channel axis, append the bias row.  All in XLA.
    z = jnp.concatenate([x_nchw, h_nchw], axis=1).astype(dtype)      # (B, Cin+Chid, H, W)
    zp = jnp.pad(z, ((0, 0), (0, 0), (pad, pad), (pad, pad)))
    patches = jnp.concatenate(
        [zp[:, :, ky:ky + H, kx:kx + W] for ky in range(K) for kx in range(K)],
        axis=1)                                                      # (B, Kp_taps*C, H, W)
    patches = patches.reshape(B, Kp, HW)
    patches = jnp.concatenate([patches, jnp.ones((B, 1, HW), dtype)], axis=1)  # (B, Kp1, HW)

    c = c_nchw.astype(dtype).reshape(B, Chid, HW)                    # (B, Chid, HW)

    G = _default_batch_splits(B) if batch_splits is None else batch_splits
    Bb = B // G

    kern = functools.partial(_convlstm_cell_kernel, Chid=Chid, Bb=Bb)
    out_sds = jax.ShapeDtypeStruct((B, Chid, HW), jnp.float32)

    og, hn, cn = pl.pallas_call(
        kern,
        out_shape=(out_sds, out_sds, out_sds),
        grid_spec=pltpu.PrefetchScalarGridSpec(
            num_scalar_prefetch=0,
            grid=(G,),
            in_specs=[
                pl.BlockSpec((Bb, Kp1, HW), lambda g: (g, 0, 0)),
                pl.BlockSpec((Bb, Chid, HW), lambda g: (g, 0, 0)),
                # Grid-invariant operands (constant block index -> no re-fetch).
                pl.BlockSpec((4 * Chid, Kp1), lambda g: (0, 0)),
                pl.BlockSpec((3 * Chid, HW), lambda g: (0, 0)),
            ],
            out_specs=(
                pl.BlockSpec((Bb, Chid, HW), lambda g: (g, 0, 0)),
                pl.BlockSpec((Bb, Chid, HW), lambda g: (g, 0, 0)),
                pl.BlockSpec((Bb, Chid, HW), lambda g: (g, 0, 0)),
            ),
        ),
        compiler_params=pltpu.CompilerParams(
            dimension_semantics=("parallel",)),
    )(patches, c, params["w"], params["wp"])

    return (og.reshape(B, Chid, H, W),
            hn.reshape(B, Chid, H, W),
            cn.reshape(B, Chid, H, W))


def make_params(key, Cin, Chid, K, H, W):
    """Deterministic synthetic parameters with the same shapes as the PyTorch module.

    Per-gate conv weights are PyTorch-layout (Cout, Cin, k, k); peephole weights
    are (Chid, H, W).  They are packed into the fused kernel-side layout:
      w  : (4*Chid, K*K*(Cin+Chid)+1) f32, gate order (i, f, o, c), last column = bias
      wp : (3*Chid, H*W)              f32, gate order (i, f, o)
    (The PyTorch __init__ zero-inits the peephole weights; random values are used
    here so that path is exercised — the cell semantics are identical.)
    """
    ks = jax.random.split(key, 12)
    s = 0.1
    # Module-order parameters: gates (i, f, c, o); peepholes (ci, cf, co).
    conv_x = [jax.random.normal(ks[i], (Chid, Cin, K, K), jnp.float32) * s
              for i in range(4)]
    conv_h = [jax.random.normal(ks[4 + i], (Chid, Chid, K, K), jnp.float32) * s
              for i in range(4)]
    bias_x = [jax.random.normal(ks[8], (4, Chid), jnp.float32)[i] * s
              for i in range(4)]
    peep = [jax.random.normal(ks[9 + i], (Chid, H, W), jnp.float32) * s
            for i in range(3)]

    Kp = K * K * (Cin + Chid)
    # Kernel gate (row) order (i, f, o, c): sigmoid gates contiguous, tanh gate last.
    order = (0, 1, 3, 2)

    def pack_gate(wx_g, wh_g):
        # (Chid, Cin, k, k) + (Chid, Chid, k, k) -> (Chid, k*k*(Cin+Chid)),
        # taps major / channels minor, matching the wrapper's im2col ordering.
        w = jnp.concatenate([wx_g, wh_g], axis=1)                 # (Chid, Cin+Chid, k, k)
        return jnp.transpose(w, (0, 2, 3, 1)).reshape(Chid, Kp)

    w_rows = jnp.concatenate([pack_gate(conv_x[g], conv_h[g]) for g in order],
                             axis=0)                              # (4*Chid, Kp)
    b_col = jnp.concatenate([bias_x[g] for g in order], axis=0)[:, None]   # (4*Chid, 1)
    w_full = jnp.concatenate([w_rows, b_col], axis=1)             # (4*Chid, Kp+1)

    wp = jnp.concatenate([p.reshape(Chid, H * W) for p in peep], axis=0)   # (3*Chid, HW)

    raw = dict(conv_x=conv_x, conv_h=conv_h, bias_x=bias_x, peep=peep)
    return {"w": w_full, "wp": wp}, raw


def reference_forward(x, h, c, raw, K):
    """Pure-JAX NCHW f32 reference matching the PyTorch cell exactly."""
    pad = K // 2

    def conv(inp, w, b=None):
        y = lax.conv_general_dilated(
            inp, w, window_strides=(1, 1), padding=[(pad, pad), (pad, pad)],
            dimension_numbers=("NCHW", "OIHW", "NCHW"))
        if b is not None:
            y = y + b[None, :, None, None]
        return y

    (wxi, wxf, wxc, wxo) = raw["conv_x"]
    (whi, whf, whc, who) = raw["conv_h"]
    (bxi, bxf, bxc, bxo) = raw["bias_x"]
    (wci, wcf, wco) = raw["peep"]

    ig = jax.nn.sigmoid(conv(x, wxi, bxi) + conv(h, whi) + wci * c)
    fg = jax.nn.sigmoid(conv(x, wxf, bxf) + conv(h, whf) + wcf * c)
    c_new = fg * c + ig * jnp.tanh(conv(x, wxc, bxc) + conv(h, whc))
    output = jax.nn.sigmoid(conv(x, wxo, bxo) + conv(h, who) + wco * c)
    h_new = output * c_new
    return output, h_new, c_new


if __name__ == "__main__":
    B, Cin, H, W = 2, 4, 16, 16
    Chid, K = 32, 3

    key = jax.random.PRNGKey(0)
    k_param, k_x, k_h, k_c = jax.random.split(key, 4)
    params, raw = make_params(k_param, Cin, Chid, K, H, W)

    x = jax.random.normal(k_x, (B, Cin, H, W), jnp.float32)
    # The module starts with zero H/C; random states are used here to exercise
    # the hidden-conv and peephole paths (the cell semantics are state-agnostic).
    h0 = jax.random.normal(k_h, (B, Chid, H, W), jnp.float32)
    c0 = jax.random.normal(k_c, (B, Chid, H, W), jnp.float32)

    out, h1, c1 = conv_lstm_forward(x, h0, c0, params, K)
    jax.block_until_ready((out, h1, c1))

    ref_out, ref_h, ref_c = reference_forward(x, h0, c0, raw, K)
    # Tolerance covers a possible bf16-pass decomposition of the f32 MXU GEMM;
    # with full-precision f32 accumulation the actual error is far smaller.
    tol = dict(atol=3e-2, rtol=3e-2)
    assert jnp.allclose(out, ref_out, **tol), float(jnp.max(jnp.abs(out - ref_out)))
    assert jnp.allclose(h1, ref_h, **tol), float(jnp.max(jnp.abs(h1 - ref_h)))
    assert jnp.allclose(c1, ref_c, **tol), float(jnp.max(jnp.abs(c1 - ref_c)))

    print("KERNEL_OK")
</pallas_src>

<mosaic_0001>
module attributes {stable_mosaic.version = 11 : i64} {
  func.func @_convlstm_cell_kernel(%arg0: i32, %arg1: memref<2x325x256xf32, #tpu.memory_space<vmem>>, %arg2: memref<2x32x256xf32, #tpu.memory_space<vmem>>, %arg3: memref<128x325xf32, #tpu.memory_space<vmem>>, %arg4: memref<96x256xf32, #tpu.memory_space<vmem>>, %arg5: memref<2x32x256xf32, #tpu.memory_space<vmem>>, %arg6: memref<2x32x256xf32, #tpu.memory_space<vmem>>, %arg7: memref<2x32x256xf32, #tpu.memory_space<vmem>>) attributes {dimension_semantics = [#tpu.dimension_semantics<parallel>], iteration_bounds = array<i64: 1>, scalar_prefetch = 0 : i64, scratch_operands = 0 : i64, tpu.core_type = #tpu.core_type<tc>, window_params = [{transform_indices = @transform_0, window_bounds = array<i64: 2, 325, 256>}, {transform_indices = @transform_1, window_bounds = array<i64: 2, 32, 256>}, {pipeline_mode = #tpu.pipeline_mode<synchronous>, transform_indices = @transform_2, window_bounds = array<i64: 128, 325>}, {pipeline_mode = #tpu.pipeline_mode<synchronous>, transform_indices = @transform_3, window_bounds = array<i64: 96, 256>}, {transform_indices = @transform_4, window_bounds = array<i64: 2, 32, 256>}, {transform_indices = @transform_5, window_bounds = array<i64: 2, 32, 256>}, {transform_indices = @transform_6, window_bounds = array<i64: 2, 32, 256>}]} {
    %c0 = arith.constant 0 : index
    %c0_0 = arith.constant 0 : index
    %0 = vector.load %arg3[%c0, %c0_0] : memref<128x325xf32, #tpu.memory_space<vmem>>, vector<128x325xf32>
    %c0_1 = arith.constant 0 : index
    %c0_2 = arith.constant 0 : index
    %1 = vector.load %arg4[%c0_1, %c0_2] : memref<96x256xf32, #tpu.memory_space<vmem>>, vector<96x256xf32>
    %2 = vector.extract_strided_slice %1 {offsets = [0, 0], sizes = [32, 256], strides = [1, 1]} : vector<96x256xf32> to vector<32x256xf32>
    %3 = vector.extract_strided_slice %1 {offsets = [32, 0], sizes = [32, 256], strides = [1, 1]} : vector<96x256xf32> to vector<32x256xf32>
    %4 = vector.extract_strided_slice %1 {offsets = [64, 0], sizes = [32, 256], strides = [1, 1]} : vector<96x256xf32> to vector<32x256xf32>
    %c0_3 = arith.constant 0 : index
    %c0_4 = arith.constant 0 : index
    %c0_5 = arith.constant 0 : index
    %5 = vector.load %arg1[%c0_3, %c0_4, %c0_5] : memref<2x325x256xf32, #tpu.memory_space<vmem>>, vector<1x325x256xf32>
    %6 = vector.shape_cast %5 : vector<1x325x256xf32> to vector<325x256xf32>
    %cst = arith.constant dense<0.000000e+00> : vector<128x256xf32>
    %7 = tpu.matmul %0, %6, %cst {dimension_numbers = #tpu.dot_dimension_numbers<[1], [0], [0], [1], [0, 0, 1, 1], [], []>} : vector<128x325xf32>, vector<325x256xf32>, vector<128x256xf32> -> vector<128x256xf32>
    %c0_6 = arith.constant 0 : index
    %c0_7 = arith.constant 0 : index
    %c0_8 = arith.constant 0 : index
    %8 = vector.load %arg2[%c0_6, %c0_7, %c0_8] : memref<2x32x256xf32, #tpu.memory_space<vmem>>, vector<1x32x256xf32>
    %9 = vector.shape_cast %8 : vector<1x32x256xf32> to vector<32x256xf32>
    %10 = vector.extract_strided_slice %7 {offsets = [0, 0], sizes = [32, 256], strides = [1, 1]} : vector<128x256xf32> to vector<32x256xf32>
    %11 = arith.mulf %2, %9 : vector<32x256xf32>
    %12 = arith.addf %10, %11 : vector<32x256xf32>
    %13 = arith.negf %12 : vector<32x256xf32>
    %14 = math.exp %13 : vector<32x256xf32>
    %cst_9 = arith.constant 1.000000e+00 : f32
    %15 = vector.broadcast %cst_9 : f32 to vector<32x256xf32>
    %16 = arith.addf %15, %14 : vector<32x256xf32>
    %17 = arith.divf %15, %16 : vector<32x256xf32>
    %18 = vector.extract_strided_slice %7 {offsets = [32, 0], sizes = [32, 256], strides = [1, 1]} : vector<128x256xf32> to vector<32x256xf32>
    %19 = arith.mulf %3, %9 : vector<32x256xf32>
    %20 = arith.addf %18, %19 : vector<32x256xf32>
    %21 = arith.negf %20 : vector<32x256xf32>
    %22 = math.exp %21 : vector<32x256xf32>
    %cst_10 = arith.constant 1.000000e+00 : f32
    %23 = vector.broadcast %cst_10 : f32 to vector<32x256xf32>
    %24 = arith.addf %23, %22 : vector<32x256xf32>
    %25 = arith.divf %23, %24 : vector<32x256xf32>
    %26 = vector.extract_strided_slice %7 {offsets = [64, 0], sizes = [32, 256], strides = [1, 1]} : vector<128x256xf32> to vector<32x256xf32>
    %27 = arith.mulf %4, %9 : vector<32x256xf32>
    %28 = arith.addf %26, %27 : vector<32x256xf32>
    %29 = arith.negf %28 : vector<32x256xf32>
    %30 = math.exp %29 : vector<32x256xf32>
    %cst_11 = arith.constant 1.000000e+00 : f32
    %31 = vector.broadcast %cst_11 : f32 to vector<32x256xf32>
    %32 = arith.addf %31, %30 : vector<32x256xf32>
    %33 = arith.divf %31, %32 : vector<32x256xf32>
    %34 = vector.extract_strided_slice %7 {offsets = [96, 0], sizes = [32, 256], strides = [1, 1]} : vector<128x256xf32> to vector<32x256xf32>
    %35 = math.tanh %34 : vector<32x256xf32>
    %36 = arith.mulf %25, %9 : vector<32x256xf32>
    %37 = arith.mulf %17, %35 : vector<32x256xf32>
    %38 = arith.addf %36, %37 : vector<32x256xf32>
    %39 = arith.mulf %33, %38 : vector<32x256xf32>
    %c0_12 = arith.constant 0 : index
    %c0_13 = arith.constant 0 : index
    %c0_14 = arith.constant 0 : index
    %40 = vector.load %arg5[%c0_12, %c0_13, %c0_14] : memref<2x32x256xf32, #tpu.memory_space<vmem>>, vector<1x32x256xf32>
    %41 = vector.shape_cast %40 : vector<1x32x256xf32> to vector<32x256xf32>
    %42 = vector.shape_cast %33 : vector<32x256xf32> to vector<1x32x256xf32>
    tpu.vector_store %arg5[%c0_12, %c0_13, %c0_14], %42 {strides = array<i32>} : memref<2x32x256xf32, #tpu.memory_space<vmem>>, vector<1x32x256xf32>,
    %c0_15 = arith.constant 0 : index
    %c0_16 = arith.constant 0 : index
    %c0_17 = arith.constant 0 : index
    %43 = vector.load %arg6[%c0_15, %c0_16, %c0_17] : memref<2x32x256xf32, #tpu.memory_space<vmem>>, vector<1x32x256xf32>
    %44 = vector.shape_cast %43 : vector<1x32x256xf32> to vector<32x256xf32>
    %45 = vector.shape_cast %39 : vector<32x256xf32> to vector<1x32x256xf32>
    tpu.vector_store %arg6[%c0_15, %c0_16, %c0_17], %45 {strides = array<i32>} : memref<2x32x256xf32, #tpu.memory_space<vmem>>, vector<1x32x256xf32>,
    %c0_18 = arith.constant 0 : index
    %c0_19 = arith.constant 0 : index
    %c0_20 = arith.constant 0 : index
    %46 = vector.load %arg7[%c0_18, %c0_19, %c0_20] : memref<2x32x256xf32, #tpu.memory_space<vmem>>, vector<1x32x256xf32>
    %47 = vector.shape_cast %46 : vector<1x32x256xf32> to vector<32x256xf32>
    %48 = vector.shape_cast %38 : vector<32x256xf32> to vector<1x32x256xf32>
    tpu.vector_store %arg7[%c0_18, %c0_19, %c0_20], %48 {strides = array<i32>} : memref<2x32x256xf32, #tpu.memory_space<vmem>>, vector<1x32x256xf32>,
    %c1 = arith.constant 1 : index
    %c0_21 = arith.constant 0 : index
    %c0_22 = arith.constant 0 : index
    %49 = vector.load %arg1[%c1, %c0_21, %c0_22] : memref<2x325x256xf32, #tpu.memory_space<vmem>>, vector<1x325x256xf32>
    %50 = vector.shape_cast %49 : vector<1x325x256xf32> to vector<325x256xf32>
    %cst_23 = arith.constant dense<0.000000e+00> : vector<128x256xf32>
    %51 = tpu.matmul %0, %50, %cst_23 {dimension_numbers = #tpu.dot_dimension_numbers<[1], [0], [0], [1], [0, 0, 1, 1], [], []>} : vector<128x325xf32>, vector<325x256xf32>, vector<128x256xf32> -> vector<128x256xf32>
    %c1_24 = arith.constant 1 : index
    %c0_25 = arith.constant 0 : index
    %c0_26 = arith.constant 0 : index
    %52 = vector.load %arg2[%c1_24, %c0_25, %c0_26] : memref<2x32x256xf32, #tpu.memory_space<vmem>>, vector<1x32x256xf32>
    %53 = vector.shape_cast %52 : vector<1x32x256xf32> to vector<32x256xf32>
    %54 = vector.extract_strided_slice %51 {offsets = [0, 0], sizes = [32, 256], strides = [1, 1]} : vector<128x256xf32> to vector<32x256xf32>
    %55 = arith.mulf %2, %53 : vector<32x256xf32>
    %56 = arith.addf %54, %55 : vector<32x256xf32>
    %57 = arith.negf %56 : vector<32x256xf32>
    %58 = math.exp %57 : vector<32x256xf32>
    %cst_27 = arith.constant 1.000000e+00 : f32
    %59 = vector.broadcast %cst_27 : f32 to vector<32x256xf32>
    %60 = arith.addf %59, %58 : vector<32x256xf32>
    %61 = arith.divf %59, %60 : vector<32x256xf32>
    %62 = vector.extract_strided_slice %51 {offsets = [32, 0], sizes = [32, 256], strides = [1, 1]} : vector<128x256xf32> to vector<32x256xf32>
    %63 = arith.mulf %3, %53 : vector<32x256xf32>
    %64 = arith.addf %62, %63 : vector<32x256xf32>
    %65 = arith.negf %64 : vector<32x256xf32>
    %66 = math.exp %65 : vector<32x256xf32>
    %cst_28 = arith.constant 1.000000e+00 : f32
    %67 = vector.broadcast %cst_28 : f32 to vector<32x256xf32>
    %68 = arith.addf %67, %66 : vector<32x256xf32>
    %69 = arith.divf %67, %68 : vector<32x256xf32>
    %70 = vector.extract_strided_slice %51 {offsets = [64, 0], sizes = [32, 256], strides = [1, 1]} : vector<128x256xf32> to vector<32x256xf32>
    %71 = arith.mulf %4, %53 : vector<32x256xf32>
    %72 = arith.addf %70, %71 : vector<32x256xf32>
    %73 = arith.negf %72 : vector<32x256xf32>
    %74 = math.exp %73 : vector<32x256xf32>
    %cst_29 = arith.constant 1.000000e+00 : f32
    %75 = vector.broadcast %cst_29 : f32 to vector<32x256xf32>
    %76 = arith.addf %75, %74 : vector<32x256xf32>
    %77 = arith.divf %75, %76 : vector<32x256xf32>
    %78 = vector.extract_strided_slice %51 {offsets = [96, 0], sizes = [32, 256], strides = [1, 1]} : vector<128x256xf32> to vector<32x256xf32>
    %79 = math.tanh %78 : vector<32x256xf32>
    %80 = arith.mulf %69, %53 : vector<32x256xf32>
    %81 = arith.mulf %61, %79 : vector<32x256xf32>
    %82 = arith.addf %80, %81 : vector<32x256xf32>
    %83 = arith.mulf %77, %82 : vector<32x256xf32>
    %c1_30 = arith.constant 1 : index
    %c0_31 = arith.constant 0 : index
    %c0_32 = arith.constant 0 : index
    %84 = vector.load %arg5[%c1_30, %c0_31, %c0_32] : memref<2x32x256xf32, #tpu.memory_space<vmem>>, vector<1x32x256xf32>
    %85 = vector.shape_cast %84 : vector<1x32x256xf32> to vector<32x256xf32>
    %86 = vector.shape_cast %77 : vector<32x256xf32> to vector<1x32x256xf32>
    tpu.vector_store %arg5[%c1_30, %c0_31, %c0_32], %86 {strides = array<i32>} : memref<2x32x256xf32, #tpu.memory_space<vmem>>, vector<1x32x256xf32>,
    %c1_33 = arith.constant 1 : index
    %c0_34 = arith.constant 0 : index
    %c0_35 = arith.constant 0 : index
    %87 = vector.load %arg6[%c1_33, %c0_34, %c0_35] : memref<2x32x256xf32, #tpu.memory_space<vmem>>, vector<1x32x256xf32>
    %88 = vector.shape_cast %87 : vector<1x32x256xf32> to vector<32x256xf32>
    %89 = vector.shape_cast %83 : vector<32x256xf32> to vector<1x32x256xf32>
    tpu.vector_store %arg6[%c1_33, %c0_34, %c0_35], %89 {strides = array<i32>} : memref<2x32x256xf32, #tpu.memory_space<vmem>>, vector<1x32x256xf32>,
    %c1_36 = arith.constant 1 : index
    %c0_37 = arith.constant 0 : index
    %c0_38 = arith.constant 0 : index
    %90 = vector.load %arg7[%c1_36, %c0_37, %c0_38] : memref<2x32x256xf32, #tpu.memory_space<vmem>>, vector<1x32x256xf32>
    %91 = vector.shape_cast %90 : vector<1x32x256xf32> to vector<32x256xf32>
    %92 = vector.shape_cast %82 : vector<32x256xf32> to vector<1x32x256xf32>
    tpu.vector_store %arg7[%c1_36, %c0_37, %c0_38], %92 {strides = array<i32>} : memref<2x32x256xf32, #tpu.memory_space<vmem>>, vector<1x32x256xf32>,
    return
  }
  func.func @transform_0(%arg0: i32) -> (i32, i32, i32) {
    %c0_i32 = arith.constant 0 : i32
    %c0_i32_0 = arith.constant 0 : i32
    %c0_i32_1 = arith.constant 0 : i32
    return %arg0, %c0_i32, %c0_i32_0 : i32, i32, i32
  }
  func.func @transform_1(%arg0: i32) -> (i32, i32, i32) {
    %c0_i32 = arith.constant 0 : i32
    %c0_i32_0 = arith.constant 0 : i32
    %c0_i32_1 = arith.constant 0 : i32
    return %arg0, %c0_i32, %c0_i32_0 : i32, i32, i32
  }
  func.func @transform_2(%arg0: i32) -> (i32, i32) {
    %c0_i32 = arith.constant 0 : i32
    %c0_i32_0 = arith.constant 0 : i32
    %c0_i32_1 = arith.constant 0 : i32
    return %c0_i32, %c0_i32_0 : i32, i32
  }
  func.func @transform_3(%arg0: i32) -> (i32, i32) {
    %c0_i32 = arith.constant 0 : i32
    %c0_i32_0 = arith.constant 0 : i32
    %c0_i32_1 = arith.constant 0 : i32
    return %c0_i32, %c0_i32_0 : i32, i32
  }
  func.func @transform_4(%arg0: i32) -> (i32, i32, i32) {
    %c0_i32 = arith.constant 0 : i32
    %c0_i32_0 = arith.constant 0 : i32
    %c0_i32_1 = arith.constant 0 : i32
    return %arg0, %c0_i32, %c0_i32_0 : i32, i32, i32
  }
  func.func @transform_5(%arg0: i32) -> (i32, i32, i32) {
    %c0_i32 = arith.constant 0 : i32
    %c0_i32_0 = arith.constant 0 : i32
    %c0_i32_1 = arith.constant 0 : i32
    return %arg0, %c0_i32, %c0_i32_0 : i32, i32, i32
  }
  func.func @transform_6(%arg0: i32) -> (i32, i32, i32) {
    %c0_i32 = arith.constant 0 : i32
    %c0_i32_0 = arith.constant 0 : i32
    %c0_i32_1 = arith.constant 0 : i32
    return %arg0, %c0_i32, %c0_i32_0 : i32, i32, i32
  }
}

</mosaic_0001>

<llo_original>
// kernel: tpu_custom_call.1
$region0: #{tpu_custom_call.1}
  #allocation0 [shape = 'u32[]', space=smem, size = 0x4, offset = 0x4, fixed_abs, tag = 'smem constant byte address 0x4 - core index']
  #allocation1 [shape = 'u32[72,128]{1,0:T(1,128)}', space=vmem, size = 0x9000, scoped, tag = 'internal scratch']
  %s0 = inlined_call_operand.vmem [shape: f32[2,325,256], index: 0, kind: input, shape index: {}]
  %s1 = inlined_call_operand.vmem [shape: f32[2,32,256], index: 1, kind: input, shape index: {}]
  %s2 = inlined_call_operand.vmem [shape: f32[128,325], index: 2, kind: input, shape index: {}]
  %s3 = inlined_call_operand.vmem [shape: f32[96,256], index: 3, kind: input, shape index: {}]
  %s4 = inlined_call_operand.hbm [shape: f32[2,32,256], index: 4, kind: output, shape index: {0}]
  %s5 = inlined_call_operand.hbm [shape: f32[2,32,256], index: 5, kind: output, shape index: {1}]
  %s6 = inlined_call_operand.hbm [shape: f32[2,32,256], index: 6, kind: output, shape index: {2}]
  %7 = xla_tuple %s4, %s5, %s6
  %s8 = sld [smem:[#allocation0]]
  $region42: #{tpu_custom_call.1} parent=0
    _
  %s10 = ssub.s32 1, %s8
  %s11 = scalar_select 0, %s10, %s8
  $region1: #{tpu_custom_call.1} parent=0
    #allocation2 [shape = 'u8[65536]{0}', space=vmem, size = 0x10000, scoped, tag = 'output window, operand 0, single buffered']
    #allocation3 [shape = 's32[1]{0}', space=sflag, size = 0x4, scoped, tag = 'scoped memory for tpu_custom_call.1']
    #allocation4 [shape = 'u8[65536]{0}', space=vmem, size = 0x10000, scoped, tag = 'output window, operand 1, single buffered']
    #allocation5 [shape = 's32[1]{0}', space=sflag, size = 0x4, scoped, tag = 'scoped memory for tpu_custom_call.1']
    #allocation6 [shape = 'u8[65536]{0}', space=vmem, size = 0x10000, scoped, tag = 'output window, operand 2, single buffered']
    %12 = vsyncpa [#allocation3], 0
    %13 = vsyncpa [#allocation5], 0
    // Predicated region
    $region2: #{tpu_custom_call.1} parent=1 // pred_check
      _
    $region3: #{tpu_custom_call.1} parent=1 // pred_check_branch
      %15 = sbr.rel (0) target = $region5
    $region4: #{tpu_custom_call.1} parent=1 // pred_region
      _
    $region5: #{tpu_custom_call.1} parent=1 // pred_fallthru
      _
    // Predicated region
    $region6: #{tpu_custom_call.1} parent=1 // pred_check
      _
    $region7: #{tpu_custom_call.1} parent=1 // pred_check_branch
      %17 = sbr.rel (0) target = $region9
    $region8: #{tpu_custom_call.1} parent=1 // pred_region
      _
    $region9: #{tpu_custom_call.1} parent=1 // pred_fallthru
      _
    // Predicated region
    $region10: #{tpu_custom_call.1} parent=1 // pred_check
      _
    $region11: #{tpu_custom_call.1} parent=1 // pred_check_branch
      %19 = sbr.rel (0) target = $region13
    $region12: #{tpu_custom_call.1} parent=1 // pred_region
      _
    $region13: #{tpu_custom_call.1} parent=1 // pred_fallthru
      _
    // Predicated region
    $region14: #{tpu_custom_call.1} parent=1 // pred_check
      _
    $region15: #{tpu_custom_call.1} parent=1 // pred_check_branch
      %21 = sbr.rel (0) target = $region17
    $region16: #{tpu_custom_call.1} parent=1 // pred_region
      _
    $region17: #{tpu_custom_call.1} parent=1 // pred_fallthru
      _
    %v22 = vld [vmem:[%s2] sm:$0xff]
    %v23 = vld [vmem:[%s2 + $0x8] sm:$0xff]
    %v24 = vld [vmem:[%s2 + $0x10] sm:$0xff]
    %v25 = vld [vmem:[%s2 + $0x18] sm:$0xff]
    %v26 = vld [vmem:[%s2 + $0x20] sm:$0xff]
    %v27 = vld [vmem:[%s2 + $0x28] sm:$0xff]
    %v28 = vld [vmem:[%s2 + $0x30] sm:$0xff]
    %v29 = vld [vmem:[%s2 + $0x38] sm:$0xff]
    %v30 = vld [vmem:[%s2 + $0x40] sm:$0xff]
    %v31 = vld [vmem:[%s2 + $0x48] sm:$0xff]
    %v32 = vld [vmem:[%s2 + $0x50] sm:$0xff]
    %v33 = vld [vmem:[%s2 + $0x58] sm:$0xff]
    %v34 = vld [vmem:[%s2 + $0x60] sm:$0xff]
    %v35 = vld [vmem:[%s2 + $0x68] sm:$0xff]
    %v36 = vld [vmem:[%s2 + $0x70] sm:$0xff]
    %v37 = vld [vmem:[%s2 + $0x78] sm:$0xff]
    %v38 = vld [vmem:[%s2 + $0x80] sm:$0xff]
    %v39 = vld [vmem:[%s2 + $0x88] sm:$0xff]
    %v40 = vld [vmem:[%s2 + $0x90] sm:$0xff]
    %v41 = vld [vmem:[%s2 + $0x98] sm:$0xff]
    %v42 = vld [vmem:[%s2 + $0xa0] sm:$0xff]
    %v43 = vld [vmem:[%s2 + $0xa8] sm:$0xff]
    %v44 = vld [vmem:[%s2 + $0xb0] sm:$0xff]
    %v45 = vld [vmem:[%s2 + $0xb8] sm:$0xff]
    %v46 = vld [vmem:[%s2 + $0xc0] sm:$0xff]
    %v47 = vld [vmem:[%s2 + $0xc8] sm:$0xff]
    %v48 = vld [vmem:[%s2 + $0xd0] sm:$0xff]
    %v49 = vld [vmem:[%s2 + $0xd8] sm:$0xff]
    %v50 = vld [vmem:[%s2 + $0xe0] sm:$0xff]
    %v51 = vld [vmem:[%s2 + $0xe8] sm:$0xff]
    %v52 = vld [vmem:[%s2 + $0xf0] sm:$0xff]
    %v53 = vld [vmem:[%s2 + $0xf8] sm:$0xff]
    %v54 = vld [vmem:[%s2 + $0x100] sm:$0xff]
    %v55 = vld [vmem:[%s2 + $0x108] sm:$0xff]
    %v56 = vld [vmem:[%s2 + $0x110] sm:$0xff]
    %v57 = vld [vmem:[%s2 + $0x118] sm:$0xff]
    %v58 = vld [vmem:[%s2 + $0x120] sm:$0xff]
    %v59 = vld [vmem:[%s2 + $0x128] sm:$0xff]
    %v60 = vld [vmem:[%s2 + $0x130] sm:$0xff]
    %v61 = vld [vmem:[%s2 + $0x138] sm:$0xff]
    %v62 = vld [vmem:[%s2 + $0x140] sm:$0xff]
    %v63 = vld [vmem:[%s2 + $0x148] sm:$0xff]
    %v64 = vld [vmem:[%s2 + $0x150] sm:$0xff]
    %v65 = vld [vmem:[%s2 + $0x158] sm:$0xff]
    %v66 = vld [vmem:[%s2 + $0x160] sm:$0xff]
    %v67 = vld [vmem:[%s2 + $0x168] sm:$0xff]
    %v68 = vld [vmem:[%s2 + $0x170] sm:$0xff]
    %v69 = vld [vmem:[%s2 + $0x178] sm:$0xff]
    %v70 = vld [vmem:[%s3] sm:$0xff]
    %v71 = vld [vmem:[%s3 + $0x8] sm:$0xff]
    %v72 = vld [vmem:[%s3 + $0x10] sm:$0xff]
    %v73 = vld [vmem:[%s3 + $0x18] sm:$0xff]
    %v74 = vld [vmem:[%s3 + $0x20] sm:$0xff]
    %v75 = vld [vmem:[%s3 + $0x28] sm:$0xff]
    %v76 = vld [vmem:[%s3 + $0x30] sm:$0xff]
    %v77 = vld [vmem:[%s3 + $0x38] sm:$0xff]
    %v78 = vld [vmem:[%s3 + $0x40] sm:$0xff]
    %v79 = vld [vmem:[%s3 + $0x48] sm:$0xff]
    %v80 = vld [vmem:[%s3 + $0x50] sm:$0xff]
    %v81 = vld [vmem:[%s3 + $0x58] sm:$0xff]
    %v82 = vld [vmem:[%s3 + $0x60] sm:$0xff]
    %v83 = vld [vmem:[%s3 + $0x68] sm:$0xff]
    %v84 = vld [vmem:[%s3 + $0x70] sm:$0xff]
    %v85 = vld [vmem:[%s3 + $0x78] sm:$0xff]
    %v86 = vld [vmem:[%s3 + $0x80] sm:$0xff]
    %v87 = vld [vmem:[%s3 + $0x88] sm:$0xff]
    %v88 = vld [vmem:[%s3 + $0x90] sm:$0xff]
    %v89 = vld [vmem:[%s3 + $0x98] sm:$0xff]
    %v90 = vld [vmem:[%s3 + $0xa0] sm:$0xff]
    %v91 = vld [vmem:[%s3 + $0xa8] sm:$0xff]
    %v92 = vld [vmem:[%s3 + $0xb0] sm:$0xff]
    %v93 = vld [vmem:[%s3 + $0xb8] sm:$0xff]
    %v94 = vld [vmem:[%s0] sm:$0xff]
    %v95 = vld [vmem:[%s0 + $0x8] sm:$0xff]
    %v96 = vld [vmem:[%s0 + $0x10] sm:$0xff]
    %v97 = vld [vmem:[%s0 + $0x18] sm:$0xff]
    %v98 = vld [vmem:[%s0 + $0x20] sm:$0xff]
    %v99 = vld [vmem:[%s0 + $0x28] sm:$0xff]
    %v100 = vld [vmem:[%s0 + $0x30] sm:$0xff]
    %v101 = vld [vmem:[%s0 + $0x38] sm:$0xff]
    %v102 = vld [vmem:[%s0 + $0x40] sm:$0xff]
    %v103 = vld [vmem:[%s0 + $0x48] sm:$0xff]
    %v104 = vld [vmem:[%s0 + $0x50] sm:$0xff]
    %v105 = vld [vmem:[%s0 + $0x58] sm:$0xff]
    %v106 = vld [vmem:[%s0 + $0x60] sm:$0xff]
    %v107 = vld [vmem:[%s0 + $0x68] sm:$0xff]
    %v108 = vld [vmem:[%s0 + $0x70] sm:$0xff]
    %v109 = vld [vmem:[%s0 + $0x78] sm:$0xff]
    %v110 = vld [vmem:[%s0 + $0x80] sm:$0xff]
    %v111 = vld [vmem:[%s0 + $0x88] sm:$0xff]
    %v112 = vld [vmem:[%s0 + $0x90] sm:$0xff]
    %v113 = vld [vmem:[%s0 + $0x98] sm:$0xff]
    %v114 = vld [vmem:[%s0 + $0xa0] sm:$0xff]
    %v115 = vld [vmem:[%s0 + $0xa8] sm:$0xff]
    %v116 = vld [vmem:[%s0 + $0xb0] sm:$0xff]
    %v117 = vld [vmem:[%s0 + $0xb8] sm:$0xff]
    %v118 = vld [vmem:[%s0 + $0xc0] sm:$0xff]
    %v119 = vld [vmem:[%s0 + $0xc8] sm:$0xff]
    %v120 = vld [vmem:[%s0 + $0xd0] sm:$0xff]
    %v121 = vld [vmem:[%s0 + $0xd8] sm:$0xff]
    %v122 = vld [vmem:[%s0 + $0xe0] sm:$0xff]
    %v123 = vld [vmem:[%s0 + $0xe8] sm:$0xff]
    %v124 = vld [vmem:[%s0 + $0xf0] sm:$0xff]
    %v125 = vld [vmem:[%s0 + $0xf8] sm:$0xff]
    %v126 = vld [vmem:[%s0 + $0x100] sm:$0xff]
    %v127 = vld [vmem:[%s0 + $0x108] sm:$0xff]
    %v128 = vld [vmem:[%s0 + $0x110] sm:$0xff]
    %v129 = vld [vmem:[%s0 + $0x118] sm:$0xff]
    %v130 = vld [vmem:[%s0 + $0x120] sm:$0xff]
    %v131 = vld [vmem:[%s0 + $0x128] sm:$0xff]
    %v132 = vld [vmem:[%s0 + $0x130] sm:$0xff]
    %v133 = vld [vmem:[%s0 + $0x138] sm:$0xff]
    %v134 = vld [vmem:[%s0 + $0x140] sm:$0xff]
    %v135 = vld [vmem:[%s0 + $0x148] sm:$0xff]
    %v136 = vld [vmem:[%s0 + $0x150] sm:$0xff]
    %v137 = vld [vmem:[%s0 + $0x158] sm:$0xff]
    %v138 = vld [vmem:[%s0 + $0x160] sm:$0xff]
    %v139 = vld [vmem:[%s0 + $0x168] sm:$0xff]
    %v140 = vld [vmem:[%s0 + $0x170] sm:$0xff]
    %v141 = vld [vmem:[%s0 + $0x178] sm:$0xff]
    %v142 = vld [vmem:[%s0 + $0x180] sm:$0xff]
    %v143 = vld [vmem:[%s0 + $0x188] sm:$0xff]
    %v144 = vld [vmem:[%s0 + $0x190] sm:$0xff]
    %v145 = vld [vmem:[%s0 + $0x198] sm:$0xff]
    %v146 = vld [vmem:[%s0 + $0x1a0] sm:$0xff]
    %v147 = vld [vmem:[%s0 + $0x1a8] sm:$0xff]
    %v148 = vld [vmem:[%s0 + $0x1b0] sm:$0xff]
    %v149 = vld [vmem:[%s0 + $0x1b8] sm:$0xff]
    %v150 = vld [vmem:[%s0 + $0x1c0] sm:$0xff]
    %v151 = vld [vmem:[%s0 + $0x1c8] sm:$0xff]
    %v152 = vld [vmem:[%s0 + $0x1d0] sm:$0xff]
    %v153 = vld [vmem:[%s0 + $0x1d8] sm:$0xff]
    %v154 = vld [vmem:[%s0 + $0x1e0] sm:$0xff]
    %v155 = vld [vmem:[%s0 + $0x1e8] sm:$0xff]
    %v156 = vld [vmem:[%s0 + $0x1f0] sm:$0xff]
    %v157 = vld [vmem:[%s0 + $0x1f8] sm:$0xff]
    %v158 = vld [vmem:[%s0 + $0x200] sm:$0xff]
    %v159 = vld [vmem:[%s0 + $0x208] sm:$0xff]
    %v160 = vld [vmem:[%s0 + $0x210] sm:$0xff]
    %v161 = vld [vmem:[%s0 + $0x218] sm:$0xff]
    %v162 = vld [vmem:[%s0 + $0x220] sm:$0xff]
    %v163 = vld [vmem:[%s0 + $0x228] sm:$0xff]
    %v164 = vld [vmem:[%s0 + $0x230] sm:$0xff]
    %v165 = vld [vmem:[%s0 + $0x238] sm:$0xff]
    %v166 = vld [vmem:[%s0 + $0x240] sm:$0xff]
    %v167 = vld [vmem:[%s0 + $0x248] sm:$0xff]
    %v168 = vld [vmem:[%s0 + $0x250] sm:$0xff]
    %v169 = vld [vmem:[%s0 + $0x258] sm:$0xff]
    %v170 = vld [vmem:[%s0 + $0x260] sm:$0xff]
    %v171 = vld [vmem:[%s0 + $0x268] sm:$0xff]
    %v172 = vld [vmem:[%s0 + $0x270] sm:$0xff]
    %v173 = vld [vmem:[%s0 + $0x278] sm:$0xff]
    %v174 = vld [vmem:[%s0 + $0x280] sm:$0x1f]
    %v175 = vld [vmem:[%s0 + $0x288] sm:$0x1f]
    %vm176 = vcmask 564224
    %v178 = vsel %vm176, %v24, 0
    %v181 = vsel %vm176, %v27, 0
    %v184 = vsel %vm176, %v30, 0
    %v187 = vsel %vm176, %v33, 0
    %v190 = vsel %vm176, %v36, 0
    %v193 = vsel %vm176, %v39, 0
    %v196 = vsel %vm176, %v42, 0
    %v199 = vsel %vm176, %v45, 0
    %v202 = vsel %vm176, %v48, 0
    %v205 = vsel %vm176, %v51, 0
    %v208 = vsel %vm176, %v54, 0
    %v211 = vsel %vm176, %v57, 0
    %v214 = vsel %vm176, %v60, 0
    %v217 = vsel %vm176, %v63, 0
    %v220 = vsel %vm176, %v66, 0
    %v223 = vsel %vm176, %v69, 0
    %vm225 = vcmask 1044480
    %v227 = vsel %vm225, %v174, 0
    %v230 = vsel %vm225, %v175, 0
    %232 = vmatpush.msra.mxu0 %v124
    %233 = vmatpush.msra.mxu0 %v122
    %234 = vmatpush.msra.mxu0 %v120
    %235 = vmatpush.msra.mxu0 %v118
    %236 = vmatpush.msra.mxu0 %v116
    %237 = vmatpush.msra.mxu0 %v114
    %238 = vmatpush.msra.mxu0 %v112
    %239 = vmatpush.msra.mxu0 %v110
    %240 = vmatpush.msra.mxu0 %v108
    %241 = vmatpush.msra.mxu0 %v106
    %242 = vmatpush.msra.mxu0 %v104
    %243 = vmatpush.msra.mxu0 %v102
    %244 = vmatpush.msra.mxu0 %v100
    %245 = vmatpush.msra.mxu0 %v98
    %246 = vmatpush.msra.mxu0 %v96
    %247 = vmatpush.msra.mxu0 %v94
    %248 = vmatmul.f32.gmra.mxu0 %v22
    %v249 = vpop.f32.mrf.mxu0
    %v250 = vadd.f32 0.0, %v249
    %251 = vmatmul.f32.gmra.mxu0 %v25
    %v252 = vpop.f32.mrf.mxu0
    %v253 = vadd.f32 0.0, %v252
    %254 = vmatmul.f32.gmra.mxu0 %v28
    %v255 = vpop.f32.mrf.mxu0
    %v256 = vadd.f32 0.0, %v255
    %257 = vmatmul.f32.gmra.mxu0 %v31
    %v258 = vpop.f32.mrf.mxu0
    %v259 = vadd.f32 0.0, %v258
    %260 = vmatmul.f32.gmra.mxu0 %v34
    %v261 = vpop.f32.mrf.mxu0
    %v262 = vadd.f32 0.0, %v261
    %263 = vmatmul.f32.gmra.mxu0 %v37
    %v264 = vpop.f32.mrf.mxu0
    %v265 = vadd.f32 0.0, %v264
    %266 = vmatmul.f32.gmra.mxu0 %v40
    %v267 = vpop.f32.mrf.mxu0
    %v268 = vadd.f32 0.0, %v267
    %269 = vmatmul.f32.gmra.mxu0 %v43
    %v270 = vpop.f32.mrf.mxu0
    %v271 = vadd.f32 0.0, %v270
    %272 = vmatmul.f32.gmra.mxu0 %v46
    %v273 = vpop.f32.mrf.mxu0
    %v274 = vadd.f32 0.0, %v273
    %275 = vmatmul.f32.gmra.mxu0 %v49
    %v276 = vpop.f32.mrf.mxu0
    %v277 = vadd.f32 0.0, %v276
    %278 = vmatmul.f32.gmra.mxu0 %v52
    %v279 = vpop.f32.mrf.mxu0
    %v280 = vadd.f32 0.0, %v279
    %281 = vmatmul.f32.gmra.mxu0 %v55
    %v282 = vpop.f32.mrf.mxu0
    %v283 = vadd.f32 0.0, %v282
    %284 = vmatmul.f32.gmra.mxu0 %v58
    %v285 = vpop.f32.mrf.mxu0
    %v286 = vadd.f32 0.0, %v285
    %287 = vmatmul.f32.gmra.mxu0 %v61
    %v288 = vpop.f32.mrf.mxu0
    %v289 = vadd.f32 0.0, %v288
    %290 = vmatmul.f32.gmra.mxu0 %v64
    %v291 = vpop.f32.mrf.mxu0
    %v292 = vadd.f32 0.0, %v291
    %293 = vmatmul.f32.gmra.mxu0 %v67
    %v294 = vpop.f32.mrf.mxu0
    %v295 = vadd.f32 0.0, %v294
    %296 = vdwg.mxu0
    %297 = vmatpush.msra.mxu0 %v156
    %298 = vmatpush.msra.mxu0 %v154
    %299 = vmatpush.msra.mxu0 %v152
    %300 = vmatpush.msra.mxu0 %v150
    %301 = vmatpush.msra.mxu0 %v148
    %302 = vmatpush.msra.mxu0 %v146
    %303 = vmatpush.msra.mxu0 %v144
    %304 = vmatpush.msra.mxu0 %v142
    %305 = vmatpush.msra.mxu0 %v140
    %306 = vmatpush.msra.mxu0 %v138
    %307 = vmatpush.msra.mxu0 %v136
    %308 = vmatpush.msra.mxu0 %v134
    %309 = vmatpush.msra.mxu0 %v132
    %310 = vmatpush.msra.mxu0 %v130
    %311 = vmatpush.msra.mxu0 %v128
    %312 = vmatpush.msra.mxu0 %v126
    %313 = vmatmul.f32.gmra.mxu0 %v23
    %v314 = vpop.f32.mrf.mxu0
    %v315 = vadd.f32 %v250, %v314
    %316 = vmatmul.f32.gmra.mxu0 %v26
    %v317 = vpop.f32.mrf.mxu0
    %v318 = vadd.f32 %v253, %v317
    %319 = vmatmul.f32.gmra.mxu0 %v29
    %v320 = vpop.f32.mrf.mxu0
    %v321 = vadd.f32 %v256, %v320
    %322 = vmatmul.f32.gmra.mxu0 %v32
    %v323 = vpop.f32.mrf.mxu0
    %v324 = vadd.f32 %v259, %v323
    %325 = vmatmul.f32.gmra.mxu0 %v35
    %v326 = vpop.f32.mrf.mxu0
    %v327 = vadd.f32 %v262, %v326
    %328 = vmatmul.f32.gmra.mxu0 %v38
    %v329 = vpop.f32.mrf.mxu0
    %v330 = vadd.f32 %v265, %v329
    %331 = vmatmul.f32.gmra.mxu0 %v41
    %v332 = vpop.f32.mrf.mxu0
    %v333 = vadd.f32 %v268, %v332
    %334 = vmatmul.f32.gmra.mxu0 %v44
    %v335 = vpop.f32.mrf.mxu0
    %v336 = vadd.f32 %v271, %v335
    %337 = vmatmul.f32.gmra.mxu0 %v47
    %v338 = vpop.f32.mrf.mxu0
    %v339 = vadd.f32 %v274, %v338
    %340 = vmatmul.f32.gmra.mxu0 %v50
    %v341 = vpop.f32.mrf.mxu0
    %v342 = vadd.f32 %v277, %v341
    %343 = vmatmul.f32.gmra.mxu0 %v53
    %v344 = vpop.f32.mrf.mxu0
    %v345 = vadd.f32 %v280, %v344
    %346 = vmatmul.f32.gmra.mxu0 %v56
    %v347 = vpop.f32.mrf.mxu0
    %v348 = vadd.f32 %v283, %v347
    %349 = vmatmul.f32.gmra.mxu0 %v59
    %v350 = vpop.f32.mrf.mxu0
    %v351 = vadd.f32 %v286, %v350
    %352 = vmatmul.f32.gmra.mxu0 %v62
    %v353 = vpop.f32.mrf.mxu0
    %v354 = vadd.f32 %v289, %v353
    %355 = vmatmul.f32.gmra.mxu0 %v65
    %v356 = vpop.f32.mrf.mxu0
    %v357 = vadd.f32 %v292, %v356
    %358 = vmatmul.f32.gmra.mxu0 %v68
    %v359 = vpop.f32.mrf.mxu0
    %v360 = vadd.f32 %v295, %v359
    %361 = vdwg.mxu0
    %362 = vmatpush.msra.mxu0 0.0
    %363 = vmatpush.msra.mxu0 0.0
    %364 = vmatpush.msra.mxu0 0.0
    %365 = vmatpush.msra.mxu0 0.0
    %366 = vmatpush.msra.mxu0 0.0
    %367 = vmatpush.msra.mxu0 0.0
    %368 = vmatpush.msra.mxu0 0.0
    %369 = vmatpush.msra.mxu0 %v227
    %370 = vmatpush.msra.mxu0 %v172
    %371 = vmatpush.msra.mxu0 %v170
    %372 = vmatpush.msra.mxu0 %v168
    %373 = vmatpush.msra.mxu0 %v166
    %374 = vmatpush.msra.mxu0 %v164
    %375 = vmatpush.msra.mxu0 %v162
    %376 = vmatpush.msra.mxu0 %v160
    %377 = vmatpush.msra.mxu0 %v158
    %378 = vmatmul.f32.gmra.mxu0 %v178
    %v379 = vpop.f32.mrf.mxu0
    %v380 = vadd.f32 %v315, %v379
    %381 = vmatmul.f32.gmra.mxu0 %v181
    %v382 = vpop.f32.mrf.mxu0
    %v383 = vadd.f32 %v318, %v382
    %384 = vmatmul.f32.gmra.mxu0 %v184
    %v385 = vpop.f32.mrf.mxu0
    %v386 = vadd.f32 %v321, %v385
    %387 = vmatmul.f32.gmra.mxu0 %v187
    %v388 = vpop.f32.mrf.mxu0
    %v389 = vadd.f32 %v324, %v388
    %390 = vmatmul.f32.gmra.mxu0 %v190
    %v391 = vpop.f32.mrf.mxu0
    %v392 = vadd.f32 %v327, %v391
    %393 = vmatmul.f32.gmra.mxu0 %v193
    %v394 = vpop.f32.mrf.mxu0
    %v395 = vadd.f32 %v330, %v394
    %396 = vmatmul.f32.gmra.mxu0 %v196
    %v397 = vpop.f32.mrf.mxu0
    %v398 = vadd.f32 %v333, %v397
    %399 = vmatmul.f32.gmra.mxu0 %v199
    %v400 = vpop.f32.mrf.mxu0
    %v401 = vadd.f32 %v336, %v400
    %402 = vmatmul.f32.gmra.mxu0 %v202
    %v403 = vpop.f32.mrf.mxu0
    %v404 = vadd.f32 %v339, %v403
    %405 = vmatmul.f32.gmra.mxu0 %v205
    %v406 = vpop.f32.mrf.mxu0
    %v407 = vadd.f32 %v342, %v406
    %408 = vmatmul.f32.gmra.mxu0 %v208
    %v409 = vpop.f32.mrf.mxu0
    %v410 = vadd.f32 %v345, %v409
    %411 = vmatmul.f32.gmra.mxu0 %v211
    %v412 = vpop.f32.mrf.mxu0
    %v413 = vadd.f32 %v348, %v412
    %414 = vmatmul.f32.gmra.mxu0 %v214
    %v415 = vpop.f32.mrf.mxu0
    %v416 = vadd.f32 %v351, %v415
    %417 = vmatmul.f32.gmra.mxu0 %v217
    %v418 = vpop.f32.mrf.mxu0
    %v419 = vadd.f32 %v354, %v418
    %420 = vmatmul.f32.gmra.mxu0 %v220
    %v421 = vpop.f32.mrf.mxu0
    %v422 = vadd.f32 %v357, %v421
    %423 = vmatmul.f32.gmra.mxu0 %v223
    %v424 = vpop.f32.mrf.mxu0
    %v425 = vadd.f32 %v360, %v424
    %426 = vdwg.mxu0
    %427 = vmatpush.msra.mxu0 %v125
    %428 = vmatpush.msra.mxu0 %v123
    %429 = vmatpush.msra.mxu0 %v121
    %430 = vmatpush.msra.mxu0 %v119
    %431 = vmatpush.msra.mxu0 %v117
    %432 = vmatpush.msra.mxu0 %v115
    %433 = vmatpush.msra.mxu0 %v113
    %434 = vmatpush.msra.mxu0 %v111
    %435 = vmatpush.msra.mxu0 %v109
    %436 = vmatpush.msra.mxu0 %v107
    %437 = vmatpush.msra.mxu0 %v105
    %438 = vmatpush.msra.mxu0 %v103
    %439 = vmatpush.msra.mxu0 %v101
    %440 = vmatpush.msra.mxu0 %v99
    %441 = vmatpush.msra.mxu0 %v97
    %442 = vmatpush.msra.mxu0 %v95
    %443 = vmatmul.f32.gmra.mxu0 %v22
    %v444 = vpop.f32.mrf.mxu0
    %v445 = vadd.f32 0.0, %v444
    %446 = vmatmul.f32.gmra.mxu0 %v25
    %v447 = vpop.f32.mrf.mxu0
    %v448 = vadd.f32 0.0, %v447
    %449 = vmatmul.f32.gmra.mxu0 %v28
    %v450 = vpop.f32.mrf.mxu0
    %v451 = vadd.f32 0.0, %v450
    %452 = vmatmul.f32.gmra.mxu0 %v31
    %v453 = vpop.f32.mrf.mxu0
    %v454 = vadd.f32 0.0, %v453
    %455 = vmatmul.f32.gmra.mxu0 %v34
    %v456 = vpop.f32.mrf.mxu0
    %v457 = vadd.f32 0.0, %v456
    %458 = vmatmul.f32.gmra.mxu0 %v37
    %v459 = vpop.f32.mrf.mxu0
    %v460 = vadd.f32 0.0, %v459
    %461 = vmatmul.f32.gmra.mxu0 %v40
    %v462 = vpop.f32.mrf.mxu0
    %v463 = vadd.f32 0.0, %v462
    %464 = vmatmul.f32.gmra.mxu0 %v43
    %v465 = vpop.f32.mrf.mxu0
    %v466 = vadd.f32 0.0, %v465
    %467 = vmatmul.f32.gmra.mxu0 %v46
    %v468 = vpop.f32.mrf.mxu0
    %v469 = vadd.f32 0.0, %v468
    %470 = vmatmul.f32.gmra.mxu0 %v49
    %v471 = vpop.f32.mrf.mxu0
    %v472 = vadd.f32 0.0, %v471
    %473 = vmatmul.f32.gmra.mxu0 %v52
    %v474 = vpop.f32.mrf.mxu0
    %v475 = vadd.f32 0.0, %v474
    %476 = vmatmul.f32.gmra.mxu0 %v55
    %v477 = vpop.f32.mrf.mxu0
    %v478 = vadd.f32 0.0, %v477
    %479 = vmatmul.f32.gmra.mxu0 %v58
    %v480 = vpop.f32.mrf.mxu0
    %v481 = vadd.f32 0.0, %v480
    %482 = vmatmul.f32.gmra.mxu0 %v61
    %v483 = vpop.f32.mrf.mxu0
    %v484 = vadd.f32 0.0, %v483
    %485 = vmatmul.f32.gmra.mxu0 %v64
    %v486 = vpop.f32.mrf.mxu0
    %v487 = vadd.f32 0.0, %v486
    %488 = vmatmul.f32.gmra.mxu0 %v67
    %v489 = vpop.f32.mrf.mxu0
    %v490 = vadd.f32 0.0, %v489
    %491 = vdwg.mxu0
    %492 = vmatpush.msra.mxu0 %v157
    %493 = vmatpush.msra.mxu0 %v155
    %494 = vmatpush.msra.mxu0 %v153
    %495 = vmatpush.msra.mxu0 %v151
    %496 = vmatpush.msra.mxu0 %v149
    %497 = vmatpush.msra.mxu0 %v147
    %498 = vmatpush.msra.mxu0 %v145
    %499 = vmatpush.msra.mxu0 %v143
    %500 = vmatpush.msra.mxu0 %v141
    %501 = vmatpush.msra.mxu0 %v139
    %502 = vmatpush.msra.mxu0 %v137
    %503 = vmatpush.msra.mxu0 %v135
    %504 = vmatpush.msra.mxu0 %v133
    %505 = vmatpush.msra.mxu0 %v131
    %506 = vmatpush.msra.mxu0 %v129
    %507 = vmatpush.msra.mxu0 %v127
    %508 = vmatmul.f32.gmra.mxu0 %v23
    %v509 = vpop.f32.mrf.mxu0
    %v510 = vadd.f32 %v445, %v509
    %511 = vmatmul.f32.gmra.mxu0 %v26
    %v512 = vpop.f32.mrf.mxu0
    %v513 = vadd.f32 %v448, %v512
    %514 = vmatmul.f32.gmra.mxu0 %v29
    %v515 = vpop.f32.mrf.mxu0
    %v516 = vadd.f32 %v451, %v515
    %517 = vmatmul.f32.gmra.mxu0 %v32
    %v518 = vpop.f32.mrf.mxu0
    %v519 = vadd.f32 %v454, %v518
    %520 = vmatmul.f32.gmra.mxu0 %v35
    %v521 = vpop.f32.mrf.mxu0
    %v522 = vadd.f32 %v457, %v521
    %523 = vmatmul.f32.gmra.mxu0 %v38
    %v524 = vpop.f32.mrf.mxu0
    %v525 = vadd.f32 %v460, %v524
    %526 = vmatmul.f32.gmra.mxu0 %v41
    %v527 = vpop.f32.mrf.mxu0
    %v528 = vadd.f32 %v463, %v527
    %529 = vmatmul.f32.gmra.mxu0 %v44
    %v530 = vpop.f32.mrf.mxu0
    %v531 = vadd.f32 %v466, %v530
    %532 = vmatmul.f32.gmra.mxu0 %v47
    %v533 = vpop.f32.mrf.mxu0
    %v534 = vadd.f32 %v469, %v533
    %535 = vmatmul.f32.gmra.mxu0 %v50
    %v536 = vpop.f32.mrf.mxu0
    %v537 = vadd.f32 %v472, %v536
    %538 = vmatmul.f32.gmra.mxu0 %v53
    %v539 = vpop.f32.mrf.mxu0
    %v540 = vadd.f32 %v475, %v539
    %541 = vmatmul.f32.gmra.mxu0 %v56
    %v542 = vpop.f32.mrf.mxu0
    %v543 = vadd.f32 %v478, %v542
    %544 = vmatmul.f32.gmra.mxu0 %v59
    %v545 = vpop.f32.mrf.mxu0
    %v546 = vadd.f32 %v481, %v545
    %547 = vmatmul.f32.gmra.mxu0 %v62
    %v548 = vpop.f32.mrf.mxu0
    %v549 = vadd.f32 %v484, %v548
    %550 = vmatmul.f32.gmra.mxu0 %v65
    %v551 = vpop.f32.mrf.mxu0
    %v552 = vadd.f32 %v487, %v551
    %553 = vmatmul.f32.gmra.mxu0 %v68
    %v554 = vpop.f32.mrf.mxu0
    %v555 = vadd.f32 %v490, %v554
    %556 = vdwg.mxu0
    %557 = vmatpush.msra.mxu0 0.0
    %558 = vmatpush.msra.mxu0 0.0
    %559 = vmatpush.msra.mxu0 0.0
    %560 = vmatpush.msra.mxu0 0.0
    %561 = vmatpush.msra.mxu0 0.0
    %562 = vmatpush.msra.mxu0 0.0
    %563 = vmatpush.msra.mxu0 0.0
    %564 = vmatpush.msra.mxu0 %v230
    %565 = vmatpush.msra.mxu0 %v173
    %566 = vmatpush.msra.mxu0 %v171
    %567 = vmatpush.msra.mxu0 %v169
    %568 = vmatpush.msra.mxu0 %v167
    %569 = vmatpush.msra.mxu0 %v165
    %570 = vmatpush.msra.mxu0 %v163
    %571 = vmatpush.msra.mxu0 %v161
    %572 = vmatpush.msra.mxu0 %v159
    %573 = vmatmul.f32.gmra.mxu0 %v178
    %v574 = vpop.f32.mrf.mxu0
    %v575 = vadd.f32 %v510, %v574
    %576 = vmatmul.f32.gmra.mxu0 %v181
    %v577 = vpop.f32.mrf.mxu0
    %v578 = vadd.f32 %v513, %v577
    %579 = vmatmul.f32.gmra.mxu0 %v184
    %v580 = vpop.f32.mrf.mxu0
    %v581 = vadd.f32 %v516, %v580
    %582 = vmatmul.f32.gmra.mxu0 %v187
    %v583 = vpop.f32.mrf.mxu0
    %v584 = vadd.f32 %v519, %v583
    %585 = vmatmul.f32.gmra.mxu0 %v190
    %v586 = vpop.f32.mrf.mxu0
    %v587 = vadd.f32 %v522, %v586
    %588 = vmatmul.f32.gmra.mxu0 %v193
    %v589 = vpop.f32.mrf.mxu0
    %v590 = vadd.f32 %v525, %v589
    %591 = vmatmul.f32.gmra.mxu0 %v196
    %v592 = vpop.f32.mrf.mxu0
    %v593 = vadd.f32 %v528, %v592
    %594 = vmatmul.f32.gmra.mxu0 %v199
    %v595 = vpop.f32.mrf.mxu0
    %v596 = vadd.f32 %v531, %v595
    %597 = vmatmul.f32.gmra.mxu0 %v202
    %v598 = vpop.f32.mrf.mxu0
    %v599 = vadd.f32 %v534, %v598
    %600 = vmatmul.f32.gmra.mxu0 %v205
    %v601 = vpop.f32.mrf.mxu0
    %v602 = vadd.f32 %v537, %v601
    %603 = vmatmul.f32.gmra.mxu0 %v208
    %v604 = vpop.f32.mrf.mxu0
    %v605 = vadd.f32 %v540, %v604
    %606 = vmatmul.f32.gmra.mxu0 %v211
    %v607 = vpop.f32.mrf.mxu0
    %v608 = vadd.f32 %v543, %v607
    %609 = vmatmul.f32.gmra.mxu0 %v214
    %v610 = vpop.f32.mrf.mxu0
    %v611 = vadd.f32 %v546, %v610
    %612 = vmatmul.f32.gmra.mxu0 %v217
    %v613 = vpop.f32.mrf.mxu0
    %v614 = vadd.f32 %v549, %v613
    %615 = vmatmul.f32.gmra.mxu0 %v220
    %v616 = vpop.f32.mrf.mxu0
    %v617 = vadd.f32 %v552, %v616
    %618 = vmatmul.f32.gmra.mxu0 %v223
    %v619 = vpop.f32.mrf.mxu0
    %v620 = vadd.f32 %v555, %v619
    %621 = vdwg.mxu0
    %v622 = vld [vmem:[%s1] sm:$0xff]
    %v623 = vld [vmem:[%s1 + $0x8] sm:$0xff]
    %v624 = vld [vmem:[%s1 + $0x10] sm:$0xff]
    %v625 = vld [vmem:[%s1 + $0x18] sm:$0xff]
    %v626 = vld [vmem:[%s1 + $0x20] sm:$0xff]
    %v627 = vld [vmem:[%s1 + $0x28] sm:$0xff]
    %v628 = vld [vmem:[%s1 + $0x30] sm:$0xff]
    %v629 = vld [vmem:[%s1 + $0x38] sm:$0xff]
    %v630 = vmul.f32 %v70, %v622
    %v631 = vmul.f32 %v71, %v623
    %v632 = vmul.f32 %v72, %v624
    %v633 = vmul.f32 %v73, %v625
    %v634 = vmul.f32 %v74, %v626
    %v635 = vmul.f32 %v75, %v627
    %v636 = vmul.f32 %v76, %v628
    %v637 = vmul.f32 %v77, %v629
    %v638 = vadd.f32 %v380, %v630
    %v639 = vadd.f32 %v575, %v631
    %v640 = vadd.f32 %v383, %v632
    %v641 = vadd.f32 %v578, %v633
    %v642 = vadd.f32 %v386, %v634
    %v643 = vadd.f32 %v581, %v635
    %v644 = vadd.f32 %v389, %v636
    %v645 = vadd.f32 %v584, %v637
    %v646 = vxor.u32 %v638, 2147483648
    %v647 = vxor.u32 %v639, 2147483648
    %v648 = vxor.u32 %v640, 2147483648
    %v649 = vxor.u32 %v641, 2147483648
    %v650 = vxor.u32 %v642, 2147483648
    %v651 = vxor.u32 %v643, 2147483648
    %v652 = vxor.u32 %v644, 2147483648
    %v653 = vxor.u32 %v645, 2147483648
    %v654 = vmul.f32 %v646, 1.442695
    %v655 = vpow.pop %v654
    %v656 = vmul.f32 %v647, 1.442695
    %v657 = vpow.pop %v656
    %v658 = vmul.f32 %v648, 1.442695
    %v659 = vpow.pop %v658
    %v660 = vmul.f32 %v649, 1.442695
    %v661 = vpow.pop %v660
    %v662 = vmul.f32 %v650, 1.442695
    %v663 = vpow.pop %v662
    %v664 = vmul.f32 %v651, 1.442695
    %v665 = vpow.pop %v664
    %v666 = vmul.f32 %v652, 1.442695
    %v667 = vpow.pop %v666
    %v668 = vmul.f32 %v653, 1.442695
    %v669 = vpow.pop %v668
    %v670 = vadd.f32 %v655, 1.0
    %v671 = vadd.f32 %v657, 1.0
    %v672 = vadd.f32 %v659, 1.0
    %v673 = vadd.f32 %v661, 1.0
    %v674 = vadd.f32 %v663, 1.0
    %v675 = vadd.f32 %v665, 1.0
    %v676 = vadd.f32 %v667, 1.0
    %v677 = vadd.f32 %v669, 1.0
    %v678 = vrcp.pop %v670
    %v679 = vmul.f32 %v670, %v678
    %v680 = vsub.f32 1.0, %v679
    %v681 = vmul.f32 %v678, %v680
    %v682 = vadd.f32 %v678, %v681
    %vm683 = vweird.f32 %v670
    %vm684 = vweird.f32 %v678
    %vm685 = vmor %vm683, %vm684
    %v686 = vsel %vm685, %v678, %v682
    %v687 = vand.u32 2147483647, %v670
    %vm688 = vcmp.eq.f32.partialorder %v687, 8.507059e+37
    %v689 = vand.u32 %v670, 2147483648
    %v690 = vor.u32 1.1754944e-38, %v689
    %v691 = vsel %vm688, %v690, %v686
    %v692 = vmul.f32 1.0, %v691
    %v693 = vrcp.pop %v671
    %v694 = vmul.f32 %v671, %v693
    %v695 = vsub.f32 1.0, %v694
    %v696 = vmul.f32 %v693, %v695
    %v697 = vadd.f32 %v693, %v696
    %vm698 = vweird.f32 %v671
    %vm699 = vweird.f32 %v693
    %vm700 = vmor %vm698, %vm699
    %v701 = vsel %vm700, %v693, %v697
    %v702 = vand.u32 2147483647, %v671
    %vm703 = vcmp.eq.f32.partialorder %v702, 8.507059e+37
    %v704 = vand.u32 %v671, 2147483648
    %v705 = vor.u32 1.1754944e-38, %v704
    %v706 = vsel %vm703, %v705, %v701
    %v707 = vmul.f32 1.0, %v706
    %v708 = vrcp.pop %v672
    %v709 = vmul.f32 %v672, %v708
    %v710 = vsub.f32 1.0, %v709
    %v711 = vmul.f32 %v708, %v710
    %v712 = vadd.f32 %v708, %v711
    %vm713 = vweird.f32 %v672
    %vm714 = vweird.f32 %v708
    %vm715 = vmor %vm713, %vm714
    %v716 = vsel %vm715, %v708, %v712
    %v717 = vand.u32 2147483647, %v672
    %vm718 = vcmp.eq.f32.partialorder %v717, 8.507059e+37
    %v719 = vand.u32 %v672, 2147483648
    %v720 = vor.u32 1.1754944e-38, %v719
    %v721 = vsel %vm718, %v720, %v716
    %v722 = vmul.f32 1.0, %v721
    %v723 = vrcp.pop %v673
    %v724 = vmul.f32 %v673, %v723
    %v725 = vsub.f32 1.0, %v724
    %v726 = vmul.f32 %v723, %v725
    %v727 = vadd.f32 %v723, %v726
    %vm728 = vweird.f32 %v673
    %vm729 = vweird.f32 %v723
    %vm730 = vmor %vm728, %vm729
    %v731 = vsel %vm730, %v723, %v727
    %v732 = vand.u32 2147483647, %v673
    %vm733 = vcmp.eq.f32.partialorder %v732, 8.507059e+37
    %v734 = vand.u32 %v673, 2147483648
    %v735 = vor.u32 1.1754944e-38, %v734
    %v736 = vsel %vm733, %v735, %v731
    %v737 = vmul.f32 1.0, %v736
    %v738 = vrcp.pop %v674
    %v739 = vmul.f32 %v674, %v738
    %v740 = vsub.f32 1.0, %v739
    %v741 = vmul.f32 %v738, %v740
    %v742 = vadd.f32 %v738, %v741
    %vm743 = vweird.f32 %v674
    %vm744 = vweird.f32 %v738
    %vm745 = vmor %vm743, %vm744
    %v746 = vsel %vm745, %v738, %v742
    %v747 = vand.u32 2147483647, %v674
    %vm748 = vcmp.eq.f32.partialorder %v747, 8.507059e+37
    %v749 = vand.u32 %v674, 2147483648
    %v750 = vor.u32 1.1754944e-38, %v749
    %v751 = vsel %vm748, %v750, %v746
    %v752 = vmul.f32 1.0, %v751
    %v753 = vrcp.pop %v675
    %v754 = vmul.f32 %v675, %v753
    %v755 = vsub.f32 1.0, %v754
    %v756 = vmul.f32 %v753, %v755
    %v757 = vadd.f32 %v753, %v756
    %vm758 = vweird.f32 %v675
    %vm759 = vweird.f32 %v753
    %vm760 = vmor %vm758, %vm759
    %v761 = vsel %vm760, %v753, %v757
    %v762 = vand.u32 2147483647, %v675
    %vm763 = vcmp.eq.f32.partialorder %v762, 8.507059e+37
    %v764 = vand.u32 %v675, 2147483648
    %v765 = vor.u32 1.1754944e-38, %v764
    %v766 = vsel %vm763, %v765, %v761
    %v767 = vmul.f32 1.0, %v766
    %v768 = vrcp.pop %v676
    %v769 = vmul.f32 %v676, %v768
    %v770 = vsub.f32 1.0, %v769
    %v771 = vmul.f32 %v768, %v770
    %v772 = vadd.f32 %v768, %v771
    %vm773 = vweird.f32 %v676
    %vm774 = vweird.f32 %v768
    %vm775 = vmor %vm773, %vm774
    %v776 = vsel %vm775, %v768, %v772
    %v777 = vand.u32 2147483647, %v676
    %vm778 = vcmp.eq.f32.partialorder %v777, 8.507059e+37
    %v779 = vand.u32 %v676, 2147483648
    %v780 = vor.u32 1.1754944e-38, %v779
    %v781 = vsel %vm778, %v780, %v776
    %v782 = vmul.f32 1.0, %v781
    %v783 = vrcp.pop %v677
    %v784 = vmul.f32 %v677, %v783
    %v785 = vsub.f32 1.0, %v784
    %v786 = vmul.f32 %v783, %v785
    %v787 = vadd.f32 %v783, %v786
    %vm788 = vweird.f32 %v677
    %vm789 = vweird.f32 %v783
    %vm790 = vmor %vm788, %vm789
    %v791 = vsel %vm790, %v783, %v787
    %v792 = vand.u32 2147483647, %v677
    %vm793 = vcmp.eq.f32.partialorder %v792, 8.507059e+37
    %v794 = vand.u32 %v677, 2147483648
    %v795 = vor.u32 1.1754944e-38, %v794
    %v796 = vsel %vm793, %v795, %v791
    %v797 = vmul.f32 1.0, %v796
    %v798 = vmul.f32 %v78, %v622
    %v799 = vmul.f32 %v79, %v623
    %v800 = vmul.f32 %v80, %v624
    %v801 = vmul.f32 %v81, %v625
    %v802 = vmul.f32 %v82, %v626
    %v803 = vmul.f32 %v83, %v627
    %v804 = vmul.f32 %v84, %v628
    %v805 = vmul.f32 %v85, %v629
    %v806 = vadd.f32 %v392, %v798
    %v807 = vadd.f32 %v587, %v799
    %v808 = vadd.f32 %v395, %v800
    %v809 = vadd.f32 %v590, %v801
    %v810 = vadd.f32 %v398, %v802
    %v811 = vadd.f32 %v593, %v803
    %v812 = vadd.f32 %v401, %v804
    %v813 = vadd.f32 %v596, %v805
    %v814 = vxor.u32 %v806, 2147483648
    %v815 = vxor.u32 %v807, 2147483648
    %v816 = vxor.u32 %v808, 2147483648
    %v817 = vxor.u32 %v809, 2147483648
    %v818 = vxor.u32 %v810, 2147483648
    %v819 = vxor.u32 %v811, 2147483648
    %v820 = vxor.u32 %v812, 2147483648
    %v821 = vxor.u32 %v813, 2147483648
    %v822 = vmul.f32 %v814, 1.442695
    %v823 = vpow.pop %v822
    %v824 = vmul.f32 %v815, 1.442695
    %v825 = vpow.pop %v824
    %v826 = vmul.f32 %v816, 1.442695
    %v827 = vpow.pop %v826
    %v828 = vmul.f32 %v817, 1.442695
    %v829 = vpow.pop %v828
    %v830 = vmul.f32 %v818, 1.442695
    %v831 = vpow.pop %v830
    %v832 = vmul.f32 %v819, 1.442695
    %v833 = vpow.pop %v832
    %v834 = vmul.f32 %v820, 1.442695
    %v835 = vpow.pop %v834
    %v836 = vmul.f32 %v821, 1.442695
    %v837 = vpow.pop %v836
    %v838 = vadd.f32 %v823, 1.0
    %v839 = vadd.f32 %v825, 1.0
    %v840 = vadd.f32 %v827, 1.0
    %v841 = vadd.f32 %v829, 1.0
    %v842 = vadd.f32 %v831, 1.0
    %v843 = vadd.f32 %v833, 1.0
    %v844 = vadd.f32 %v835, 1.0
    %v845 = vadd.f32 %v837, 1.0
    %v846 = vrcp.pop %v838
    %v847 = vmul.f32 %v838, %v846
    %v848 = vsub.f32 1.0, %v847
    %v849 = vmul.f32 %v846, %v848
    %v850 = vadd.f32 %v846, %v849
    %vm851 = vweird.f32 %v838
    %vm852 = vweird.f32 %v846
    %vm853 = vmor %vm851, %vm852
    %v854 = vsel %vm853, %v846, %v850
    %v855 = vand.u32 2147483647, %v838
    %vm856 = vcmp.eq.f32.partialorder %v855, 8.507059e+37
    %v857 = vand.u32 %v838, 2147483648
    %v858 = vor.u32 1.1754944e-38, %v857
    %v859 = vsel %vm856, %v858, %v854
    %v860 = vmul.f32 1.0, %v859
    %v861 = vrcp.pop %v839
    %v862 = vmul.f32 %v839, %v861
    %v863 = vsub.f32 1.0, %v862
    %v864 = vmul.f32 %v861, %v863
    %v865 = vadd.f32 %v861, %v864
    %vm866 = vweird.f32 %v839
    %vm867 = vweird.f32 %v861
    %vm868 = vmor %vm866, %vm867
    %v869 = vsel %vm868, %v861, %v865
    %v870 = vand.u32 2147483647, %v839
    %vm871 = vcmp.eq.f32.partialorder %v870, 8.507059e+37
    %v872 = vand.u32 %v839, 2147483648
    %v873 = vor.u32 1.1754944e-38, %v872
    %v874 = vsel %vm871, %v873, %v869
    %v875 = vmul.f32 1.0, %v874
    %v876 = vrcp.pop %v840
    %v877 = vmul.f32 %v840, %v876
    %v878 = vsub.f32 1.0, %v877
    %v879 = vmul.f32 %v876, %v878
    %v880 = vadd.f32 %v876, %v879
    %vm881 = vweird.f32 %v840
    %vm882 = vweird.f32 %v876
    %vm883 = vmor %vm881, %vm882
    %v884 = vsel %vm883, %v876, %v880
    %v885 = vand.u32 2147483647, %v840
    %vm886 = vcmp.eq.f32.partialorder %v885, 8.507059e+37
    %v887 = vand.u32 %v840, 2147483648
    %v888 = vor.u32 1.1754944e-38, %v887
    %v889 = vsel %vm886, %v888, %v884
    %v890 = vmul.f32 1.0, %v889
    %v891 = vrcp.pop %v841
    %v892 = vmul.f32 %v841, %v891
    %v893 = vsub.f32 1.0, %v892
    %v894 = vmul.f32 %v891, %v893
    %v895 = vadd.f32 %v891, %v894
    %vm896 = vweird.f32 %v841
    %vm897 = vweird.f32 %v891
    %vm898 = vmor %vm896, %vm897
    %v899 = vsel %vm898, %v891, %v895
    %v900 = vand.u32 2147483647, %v841
    %vm901 = vcmp.eq.f32.partialorder %v900, 8.507059e+37
    %v902 = vand.u32 %v841, 2147483648
    %v903 = vor.u32 1.1754944e-38, %v902
    %v904 = vsel %vm901, %v903, %v899
    %v905 = vmul.f32 1.0, %v904
    %v906 = vrcp.pop %v842
    %v907 = vmul.f32 %v842, %v906
    %v908 = vsub.f32 1.0, %v907
    %v909 = vmul.f32 %v906, %v908
    %v910 = vadd.f32 %v906, %v909
    %vm911 = vweird.f32 %v842
    %vm912 = vweird.f32 %v906
    %vm913 = vmor %vm911, %vm912
    %v914 = vsel %vm913, %v906, %v910
    %v915 = vand.u32 2147483647, %v842
    %vm916 = vcmp.eq.f32.partialorder %v915, 8.507059e+37
    %v917 = vand.u32 %v842, 2147483648
    %v918 = vor.u32 1.1754944e-38, %v917
    %v919 = vsel %vm916, %v918, %v914
    %v920 = vmul.f32 1.0, %v919
    %v921 = vrcp.pop %v843
    %v922 = vmul.f32 %v843, %v921
    %v923 = vsub.f32 1.0, %v922
    %v924 = vmul.f32 %v921, %v923
    %v925 = vadd.f32 %v921, %v924
    %vm926 = vweird.f32 %v843
    %vm927 = vweird.f32 %v921
    %vm928 = vmor %vm926, %vm927
    %v929 = vsel %vm928, %v921, %v925
    %v930 = vand.u32 2147483647, %v843
    %vm931 = vcmp.eq.f32.partialorder %v930, 8.507059e+37
    %v932 = vand.u32 %v843, 2147483648
    %v933 = vor.u32 1.1754944e-38, %v932
    %v934 = vsel %vm931, %v933, %v929
    %v935 = vmul.f32 1.0, %v934
    %v936 = vrcp.pop %v844
    %v937 = vmul.f32 %v844, %v936
    %v938 = vsub.f32 1.0, %v937
    %v939 = vmul.f32 %v936, %v938
    %v940 = vadd.f32 %v936, %v939
    %vm941 = vweird.f32 %v844
    %vm942 = vweird.f32 %v936
    %vm943 = vmor %vm941, %vm942
    %v944 = vsel %vm943, %v936, %v940
    %v945 = vand.u32 2147483647, %v844
    %vm946 = vcmp.eq.f32.partialorder %v945, 8.507059e+37
    %v947 = vand.u32 %v844, 2147483648
    %v948 = vor.u32 1.1754944e-38, %v947
    %v949 = vsel %vm946, %v948, %v944
    %v950 = vmul.f32 1.0, %v949
    %v951 = vrcp.pop %v845
    %v952 = vmul.f32 %v845, %v951
    %v953 = vsub.f32 1.0, %v952
    %v954 = vmul.f32 %v951, %v953
    %v955 = vadd.f32 %v951, %v954
    %vm956 = vweird.f32 %v845
    %vm957 = vweird.f32 %v951
    %vm958 = vmor %vm956, %vm957
    %v959 = vsel %vm958, %v951, %v955
    %v960 = vand.u32 2147483647, %v845
    %vm961 = vcmp.eq.f32.partialorder %v960, 8.507059e+37
    %v962 = vand.u32 %v845, 2147483648
    %v963 = vor.u32 1.1754944e-38, %v962
    %v964 = vsel %vm961, %v963, %v959
    %v965 = vmul.f32 1.0, %v964
    %v966 = vmul.f32 %v86, %v622
    %v967 = vmul.f32 %v87, %v623
    %v968 = vmul.f32 %v88, %v624
    %v969 = vmul.f32 %v89, %v625
    %v970 = vmul.f32 %v90, %v626
    %v971 = vmul.f32 %v91, %v627
    %v972 = vmul.f32 %v92, %v628
    %v973 = vmul.f32 %v93, %v629
    %v974 = vadd.f32 %v404, %v966
    %v975 = vadd.f32 %v599, %v967
    %v976 = vadd.f32 %v407, %v968
    %v977 = vadd.f32 %v602, %v969
    %v978 = vadd.f32 %v410, %v970
    %v979 = vadd.f32 %v605, %v971
    %v980 = vadd.f32 %v413, %v972
    %v981 = vadd.f32 %v608, %v973
    %v982 = vxor.u32 %v974, 2147483648
    %v983 = vxor.u32 %v975, 2147483648
    %v984 = vxor.u32 %v976, 2147483648
    %v985 = vxor.u32 %v977, 2147483648
    %v986 = vxor.u32 %v978, 2147483648
    %v987 = vxor.u32 %v979, 2147483648
    %v988 = vxor.u32 %v980, 2147483648
    %v989 = vxor.u32 %v981, 2147483648
    %v990 = vmul.f32 %v982, 1.442695
    %v991 = vpow.pop %v990
    %v992 = vmul.f32 %v983, 1.442695
    %v993 = vpow.pop %v992
    %v994 = vmul.f32 %v984, 1.442695
    %v995 = vpow.pop %v994
    %v996 = vmul.f32 %v985, 1.442695
    %v997 = vpow.pop %v996
    %v998 = vmul.f32 %v986, 1.442695
    %v999 = vpow.pop %v998
    %v1000 = vmul.f32 %v987, 1.442695
    %v1001 = vpow.pop %v1000
    %v1002 = vmul.f32 %v988, 1.442695
    %v1003 = vpow.pop %v1002
    %v1004 = vmul.f32 %v989, 1.442695
    %v1005 = vpow.pop %v1004
    %v1006 = vadd.f32 %v991, 1.0
    %v1007 = vadd.f32 %v993, 1.0
    %v1008 = vadd.f32 %v995, 1.0
    %v1009 = vadd.f32 %v997, 1.0
    %v1010 = vadd.f32 %v999, 1.0
    %v1011 = vadd.f32 %v1001, 1.0
    %v1012 = vadd.f32 %v1003, 1.0
    %v1013 = vadd.f32 %v1005, 1.0
    %v1014 = vrcp.pop %v1006
    %v1015 = vmul.f32 %v1006, %v1014
    %v1016 = vsub.f32 1.0, %v1015
    %v1017 = vmul.f32 %v1014, %v1016
    %v1018 = vadd.f32 %v1014, %v1017
    %vm1019 = vweird.f32 %v1006
    %vm1020 = vweird.f32 %v1014
    %vm1021 = vmor %vm1019, %vm1020
    %v1022 = vsel %vm1021, %v1014, %v1018
    %v1023 = vand.u32 2147483647, %v1006
    %vm1024 = vcmp.eq.f32.partialorder %v1023, 8.507059e+37
    %v1025 = vand.u32 %v1006, 2147483648
    %v1026 = vor.u32 1.1754944e-38, %v1025
    %v1027 = vsel %vm1024, %v1026, %v1022
    %v1028 = vmul.f32 1.0, %v1027
    %v1029 = vrcp.pop %v1007
    %v1030 = vmul.f32 %v1007, %v1029
    %v1031 = vsub.f32 1.0, %v1030
    %v1032 = vmul.f32 %v1029, %v1031
    %v1033 = vadd.f32 %v1029, %v1032
    %vm1034 = vweird.f32 %v1007
    %vm1035 = vweird.f32 %v1029
    %vm1036 = vmor %vm1034, %vm1035
    %v1037 = vsel %vm1036, %v1029, %v1033
    %v1038 = vand.u32 2147483647, %v1007
    %vm1039 = vcmp.eq.f32.partialorder %v1038, 8.507059e+37
    %v1040 = vand.u32 %v1007, 2147483648
    %v1041 = vor.u32 1.1754944e-38, %v1040
    %v1042 = vsel %vm1039, %v1041, %v1037
    %v1043 = vmul.f32 1.0, %v1042
    %v1044 = vrcp.pop %v1008
    %v1045 = vmul.f32 %v1008, %v1044
    %v1046 = vsub.f32 1.0, %v1045
    %v1047 = vmul.f32 %v1044, %v1046
    %v1048 = vadd.f32 %v1044, %v1047
    %vm1049 = vweird.f32 %v1008
    %vm1050 = vweird.f32 %v1044
    %vm1051 = vmor %vm1049, %vm1050
    %v1052 = vsel %vm1051, %v1044, %v1048
    %v1053 = vand.u32 2147483647, %v1008
    %vm1054 = vcmp.eq.f32.partialorder %v1053, 8.507059e+37
    %v1055 = vand.u32 %v1008, 2147483648
    %v1056 = vor.u32 1.1754944e-38, %v1055
    %v1057 = vsel %vm1054, %v1056, %v1052
    %v1058 = vmul.f32 1.0, %v1057
    %v1059 = vrcp.pop %v1009
    %v1060 = vmul.f32 %v1009, %v1059
    %v1061 = vsub.f32 1.0, %v1060
    %v1062 = vmul.f32 %v1059, %v1061
    %v1063 = vadd.f32 %v1059, %v1062
    %vm1064 = vweird.f32 %v1009
    %vm1065 = vweird.f32 %v1059
    %vm1066 = vmor %vm1064, %vm1065
    %v1067 = vsel %vm1066, %v1059, %v1063
    %v1068 = vand.u32 2147483647, %v1009
    %vm1069 = vcmp.eq.f32.partialorder %v1068, 8.507059e+37
    %v1070 = vand.u32 %v1009, 2147483648
    %v1071 = vor.u32 1.1754944e-38, %v1070
    %v1072 = vsel %vm1069, %v1071, %v1067
    %v1073 = vmul.f32 1.0, %v1072
    %v1074 = vrcp.pop %v1010
    %v1075 = vmul.f32 %v1010, %v1074
    %v1076 = vsub.f32 1.0, %v1075
    %v1077 = vmul.f32 %v1074, %v1076
    %v1078 = vadd.f32 %v1074, %v1077
    %vm1079 = vweird.f32 %v1010
    %vm1080 = vweird.f32 %v1074
    %vm1081 = vmor %vm1079, %vm1080
    %v1082 = vsel %vm1081, %v1074, %v1078
    %v1083 = vand.u32 2147483647, %v1010
    %vm1084 = vcmp.eq.f32.partialorder %v1083, 8.507059e+37
    %v1085 = vand.u32 %v1010, 2147483648
    %v1086 = vor.u32 1.1754944e-38, %v1085
    %v1087 = vsel %vm1084, %v1086, %v1082
    %v1088 = vmul.f32 1.0, %v1087
    %v1089 = vrcp.pop %v1011
    %v1090 = vmul.f32 %v1011, %v1089
    %v1091 = vsub.f32 1.0, %v1090
    %v1092 = vmul.f32 %v1089, %v1091
    %v1093 = vadd.f32 %v1089, %v1092
    %vm1094 = vweird.f32 %v1011
    %vm1095 = vweird.f32 %v1089
    %vm1096 = vmor %vm1094, %vm1095
    %v1097 = vsel %vm1096, %v1089, %v1093
    %v1098 = vand.u32 2147483647, %v1011
    %vm1099 = vcmp.eq.f32.partialorder %v1098, 8.507059e+37
    %v1100 = vand.u32 %v1011, 2147483648
    %v1101 = vor.u32 1.1754944e-38, %v1100
    %v1102 = vsel %vm1099, %v1101, %v1097
    %v1103 = vmul.f32 1.0, %v1102
    %v1104 = vrcp.pop %v1012
    %v1105 = vmul.f32 %v1012, %v1104
    %v1106 = vsub.f32 1.0, %v1105
    %v1107 = vmul.f32 %v1104, %v1106
    %v1108 = vadd.f32 %v1104, %v1107
    %vm1109 = vweird.f32 %v1012
    %vm1110 = vweird.f32 %v1104
    %vm1111 = vmor %vm1109, %vm1110
    %v1112 = vsel %vm1111, %v1104, %v1108
    %v1113 = vand.u32 2147483647, %v1012
    %vm1114 = vcmp.eq.f32.partialorder %v1113, 8.507059e+37
    %v1115 = vand.u32 %v1012, 2147483648
    %v1116 = vor.u32 1.1754944e-38, %v1115
    %v1117 = vsel %vm1114, %v1116, %v1112
    %v1118 = vmul.f32 1.0, %v1117
    %v1119 = vrcp.pop %v1013
    %v1120 = vmul.f32 %v1013, %v1119
    %v1121 = vsub.f32 1.0, %v1120
    %v1122 = vmul.f32 %v1119, %v1121
    %v1123 = vadd.f32 %v1119, %v1122
    %vm1124 = vweird.f32 %v1013
    %vm1125 = vweird.f32 %v1119
    %vm1126 = vmor %vm1124, %vm1125
    %v1127 = vsel %vm1126, %v1119, %v1123
    %v1128 = vand.u32 2147483647, %v1013
    %vm1129 = vcmp.eq.f32.partialorder %v1128, 8.507059e+37
    %v1130 = vand.u32 %v1013, 2147483648
    %v1131 = vor.u32 1.1754944e-38, %v1130
    %v1132 = vsel %vm1129, %v1131, %v1127
    %v1133 = vmul.f32 1.0, %v1132
    %v1134 = vtanh.pop %v416
    %v1135 = vtanh.pop %v611
    %v1136 = vtanh.pop %v419
    %v1137 = vtanh.pop %v614
    %v1138 = vtanh.pop %v422
    %v1139 = vtanh.pop %v617
    %v1140 = vtanh.pop %v425
    %v1141 = vtanh.pop %v620
    %v1142 = vmul.f32 %v860, %v622
    %v1143 = vmul.f32 %v875, %v623
    %v1144 = vmul.f32 %v890, %v624
    %v1145 = vmul.f32 %v905, %v625
    %v1146 = vmul.f32 %v920, %v626
    %v1147 = vmul.f32 %v935, %v627
    %v1148 = vmul.f32 %v950, %v628
    %v1149 = vmul.f32 %v965, %v629
    %v1150 = vmul.f32 %v692, %v1134
    %v1151 = vmul.f32 %v707, %v1135
    %v1152 = vmul.f32 %v722, %v1136
    %v1153 = vmul.f32 %v737, %v1137
    %v1154 = vmul.f32 %v752, %v1138
    %v1155 = vmul.f32 %v767, %v1139
    %v1156 = vmul.f32 %v782, %v1140
    %v1157 = vmul.f32 %v797, %v1141
    %v1158 = vadd.f32 %v1142, %v1150
    %v1159 = vadd.f32 %v1143, %v1151
    %v1160 = vadd.f32 %v1144, %v1152
    %v1161 = vadd.f32 %v1145, %v1153
    %v1162 = vadd.f32 %v1146, %v1154
    %v1163 = vadd.f32 %v1147, %v1155
    %v1164 = vadd.f32 %v1148, %v1156
    %v1165 = vadd.f32 %v1149, %v1157
    %v1166 = vmul.f32 %v1028, %v1158
    %v1167 = vmul.f32 %v1043, %v1159
    %v1168 = vmul.f32 %v1058, %v1160
    %v1169 = vmul.f32 %v1073, %v1161
    %v1170 = vmul.f32 %v1088, %v1162
    %v1171 = vmul.f32 %v1103, %v1163
    %v1172 = vmul.f32 %v1118, %v1164
    %v1173 = vmul.f32 %v1133, %v1165
    %1174 = vst [vmem:[#allocation2] sm:$0xff] %v1028
    %1175 = vst [vmem:[#allocation2 + $0x8] sm:$0xff] %v1043
    %1176 = vst [vmem:[#allocation2 + $0x10] sm:$0xff] %v1058
    %1177 = vst [vmem:[#allocation2 + $0x18] sm:$0xff] %v1073
    %1178 = vst [vmem:[#allocation2 + $0x20] sm:$0xff] %v1088
    %1179 = vst [vmem:[#allocation2 + $0x28] sm:$0xff] %v1103
    %1180 = vst [vmem:[#allocation2 + $0x30] sm:$0xff] %v1118
    %1181 = vst [vmem:[#allocation2 + $0x38] sm:$0xff] %v1133
    %1182 = vst [vmem:[#allocation4] sm:$0xff] %v1166
    %1183 = vst [vmem:[#allocation4 + $0x8] sm:$0xff] %v1167
    %1184 = vst [vmem:[#allocation4 + $0x10] sm:$0xff] %v1168
    %1185 = vst [vmem:[#allocation4 + $0x18] sm:$0xff] %v1169
    %1186 = vst [vmem:[#allocation4 + $0x20] sm:$0xff] %v1170
    %1187 = vst [vmem:[#allocation4 + $0x28] sm:$0xff] %v1171
    %1188 = vst [vmem:[#allocation4 + $0x30] sm:$0xff] %v1172
    %1189 = vst [vmem:[#allocation4 + $0x38] sm:$0xff] %v1173
    %1190 = vst [vmem:[#allocation6] sm:$0xff] %v1158
    %1191 = vst [vmem:[#allocation6 + $0x8] sm:$0xff] %v1159
    %1192 = vst [vmem:[#allocation6 + $0x10] sm:$0xff] %v1160
    %1193 = vst [vmem:[#allocation6 + $0x18] sm:$0xff] %v1161
    %1194 = vst [vmem:[#allocation6 + $0x20] sm:$0xff] %v1162
    %1195 = vst [vmem:[#allocation6 + $0x28] sm:$0xff] %v1163
    %1196 = vst [vmem:[#allocation6 + $0x30] sm:$0xff] %v1164
    %1197 = vst [vmem:[#allocation6 + $0x38] sm:$0xff] %v1165
    %s1198 = scalar_lea.vmem %s0, 656
    %v1199 = vld [vmem:[%s1198] sm:$0xff]
    %v1200 = vld [vmem:[%s1198 + $0x8] sm:$0xff]
    %v1201 = vld [vmem:[%s1198 + $0x10] sm:$0xff]
    %v1202 = vld [vmem:[%s1198 + $0x18] sm:$0xff]
    %v1203 = vld [vmem:[%s1198 + $0x20] sm:$0xff]
    %v1204 = vld [vmem:[%s1198 + $0x28] sm:$0xff]
    %v1205 = vld [vmem:[%s1198 + $0x30] sm:$0xff]
    %v1206 = vld [vmem:[%s1198 + $0x38] sm:$0xff]
    %v1207 = vld [vmem:[%s1198 + $0x40] sm:$0xff]
    %v1208 = vld [vmem:[%s1198 + $0x48] sm:$0xff]
    %v1209 = vld [vmem:[%s1198 + $0x50] sm:$0xff]
    %v1210 = vld [vmem:[%s1198 + $0x58] sm:$0xff]
    %v1211 = vld [vmem:[%s1198 + $0x60] sm:$0xff]
    %v1212 = vld [vmem:[%s1198 + $0x68] sm:$0xff]
    %v1213 = vld [vmem:[%s1198 + $0x70] sm:$0xff]
    %v1214 = vld [vmem:[%s1198 + $0x78] sm:$0xff]
    %v1215 = vld [vmem:[%s1198 + $0x80] sm:$0xff]
    %v1216 = vld [vmem:[%s1198 + $0x88] sm:$0xff]
    %v1217 = vld [vmem:[%s1198 + $0x90] sm:$0xff]
    %v1218 = vld [vmem:[%s1198 + $0x98] sm:$0xff]
    %v1219 = vld [vmem:[%s1198 + $0xa0] sm:$0xff]
    %v1220 = vld [vmem:[%s1198 + $0xa8] sm:$0xff]
    %v1221 = vld [vmem:[%s1198 + $0xb0] sm:$0xff]
    %v1222 = vld [vmem:[%s1198 + $0xb8] sm:$0xff]
    %v1223 = vld [vmem:[%s1198 + $0xc0] sm:$0xff]
    %v1224 = vld [vmem:[%s1198 + $0xc8] sm:$0xff]
    %v1225 = vld [vmem:[%s1198 + $0xd0] sm:$0xff]
    %v1226 = vld [vmem:[%s1198 + $0xd8] sm:$0xff]
    %v1227 = vld [vmem:[%s1198 + $0xe0] sm:$0xff]
    %v1228 = vld [vmem:[%s1198 + $0xe8] sm:$0xff]
    %v1229 = vld [vmem:[%s1198 + $0xf0] sm:$0xff]
    %v1230 = vld [vmem:[%s1198 + $0xf8] sm:$0xff]
    %v1231 = vld [vmem:[%s1198 + $0x100] sm:$0xff]
    %v1232 = vld [vmem:[%s1198 + $0x108] sm:$0xff]
    %v1233 = vld [vmem:[%s1198 + $0x110] sm:$0xff]
    %v1234 = vld [vmem:[%s1198 + $0x118] sm:$0xff]
    %v1235 = vld [vmem:[%s1198 + $0x120] sm:$0xff]
    %v1236 = vld [vmem:[%s1198 + $0x128] sm:$0xff]
    %v1237 = vld [vmem:[%s1198 + $0x130] sm:$0xff]
    %v1238 = vld [vmem:[%s1198 + $0x138] sm:$0xff]
    %v1239 = vld [vmem:[%s1198 + $0x140] sm:$0xff]
    %v1240 = vld [vmem:[%s1198 + $0x148] sm:$0xff]
    %v1241 = vld [vmem:[%s1198 + $0x150] sm:$0xff]
    %v1242 = vld [vmem:[%s1198 + $0x158] sm:$0xff]
    %v1243 = vld [vmem:[%s1198 + $0x160] sm:$0xff]
    %v1244 = vld [vmem:[%s1198 + $0x168] sm:$0xff]
    %v1245 = vld [vmem:[%s1198 + $0x170] sm:$0xff]
    %v1246 = vld [vmem:[%s1198 + $0x178] sm:$0xff]
    %v1247 = vld [vmem:[%s1198 + $0x180] sm:$0xff]
    %v1248 = vld [vmem:[%s1198 + $0x188] sm:$0xff]
    %v1249 = vld [vmem:[%s1198 + $0x190] sm:$0xff]
    %v1250 = vld [vmem:[%s1198 + $0x198] sm:$0xff]
    %v1251 = vld [vmem:[%s1198 + $0x1a0] sm:$0xff]
    %v1252 = vld [vmem:[%s1198 + $0x1a8] sm:$0xff]
    %v1253 = vld [vmem:[%s1198 + $0x1b0] sm:$0xff]
    %v1254 = vld [vmem:[%s1198 + $0x1b8] sm:$0xff]
    %v1255 = vld [vmem:[%s1198 + $0x1c0] sm:$0xff]
    %v1256 = vld [vmem:[%s1198 + $0x1c8] sm:$0xff]
    %v1257 = vld [vmem:[%s1198 + $0x1d0] sm:$0xff]
    %v1258 = vld [vmem:[%s1198 + $0x1d8] sm:$0xff]
    %v1259 = vld [vmem:[%s1198 + $0x1e0] sm:$0xff]
    %v1260 = vld [vmem:[%s1198 + $0x1e8] sm:$0xff]
    %v1261 = vld [vmem:[%s1198 + $0x1f0] sm:$0xff]
    %v1262 = vld [vmem:[%s1198 + $0x1f8] sm:$0xff]
    %v1263 = vld [vmem:[%s1198 + $0x200] sm:$0xff]
    %v1264 = vld [vmem:[%s1198 + $0x208] sm:$0xff]
    %v1265 = vld [vmem:[%s1198 + $0x210] sm:$0xff]
    %v1266 = vld [vmem:[%s1198 + $0x218] sm:$0xff]
    %v1267 = vld [vmem:[%s1198 + $0x220] sm:$0xff]
    %v1268 = vld [vmem:[%s1198 + $0x228] sm:$0xff]
    %v1269 = vld [vmem:[%s1198 + $0x230] sm:$0xff]
    %v1270 = vld [vmem:[%s1198 + $0x238] sm:$0xff]
    %v1271 = vld [vmem:[%s1198 + $0x240] sm:$0xff]
    %v1272 = vld [vmem:[%s1198 + $0x248] sm:$0xff]
    %v1273 = vld [vmem:[%s1198 + $0x250] sm:$0xff]
    %v1274 = vld [vmem:[%s1198 + $0x258] sm:$0xff]
    %v1275 = vld [vmem:[%s1198 + $0x260] sm:$0xff]
    %v1276 = vld [vmem:[%s1198 + $0x268] sm:$0xff]
    %v1277 = vld [vmem:[%s1198 + $0x270] sm:$0xff]
    %v1278 = vld [vmem:[%s1198 + $0x278] sm:$0xff]
    %v1279 = vld [vmem:[%s1198 + $0x280] sm:$0x1f]
    %v1280 = vld [vmem:[%s1198 + $0x288] sm:$0x1f]
    %v1282 = vsel %vm225, %v1279, 0
    %v1285 = vsel %vm225, %v1280, 0
    %1287 = vmatpush.msra.mxu0 %v1229
    %1288 = vmatpush.msra.mxu0 %v1227
    %1289 = vmatpush.msra.mxu0 %v1225
    %1290 = vmatpush.msra.mxu0 %v1223
    %1291 = vmatpush.msra.mxu0 %v1221
    %1292 = vmatpush.msra.mxu0 %v1219
    %1293 = vmatpush.msra.mxu0 %v1217
    %1294 = vmatpush.msra.mxu0 %v1215
    %1295 = vmatpush.msra.mxu0 %v1213
    %1296 = vmatpush.msra.mxu0 %v1211
    %1297 = vmatpush.msra.mxu0 %v1209
    %1298 = vmatpush.msra.mxu0 %v1207
    %1299 = vmatpush.msra.mxu0 %v1205
    %1300 = vmatpush.msra.mxu0 %v1203
    %1301 = vmatpush.msra.mxu0 %v1201
    %1302 = vmatpush.msra.mxu0 %v1199
    %1303 = vmatmul.f32.gmra.mxu0 %v22
    %v1304 = vpop.f32.mrf.mxu0
    %v1305 = vadd.f32 0.0, %v1304
    %1306 = vmatmul.f32.gmra.mxu0 %v25
    %v1307 = vpop.f32.mrf.mxu0
    %v1308 = vadd.f32 0.0, %v1307
    %1309 = vmatmul.f32.gmra.mxu0 %v28
    %v1310 = vpop.f32.mrf.mxu0
    %v1311 = vadd.f32 0.0, %v1310
    %1312 = vmatmul.f32.gmra.mxu0 %v31
    %v1313 = vpop.f32.mrf.mxu0
    %v1314 = vadd.f32 0.0, %v1313
    %1315 = vmatmul.f32.gmra.mxu0 %v34
    %v1316 = vpop.f32.mrf.mxu0
    %v1317 = vadd.f32 0.0, %v1316
    %1318 = vmatmul.f32.gmra.mxu0 %v37
    %v1319 = vpop.f32.mrf.mxu0
    %v1320 = vadd.f32 0.0, %v1319
    %1321 = vmatmul.f32.gmra.mxu0 %v40
    %v1322 = vpop.f32.mrf.mxu0
    %v1323 = vadd.f32 0.0, %v1322
    %1324 = vmatmul.f32.gmra.mxu0 %v43
    %v1325 = vpop.f32.mrf.mxu0
    %v1326 = vadd.f32 0.0, %v1325
    %1327 = vmatmul.f32.gmra.mxu0 %v46
    %v1328 = vpop.f32.mrf.mxu0
    %v1329 = vadd.f32 0.0, %v1328
    %1330 = vmatmul.f32.gmra.mxu0 %v49
    %v1331 = vpop.f32.mrf.mxu0
    %v1332 = vadd.f32 0.0, %v1331
    %1333 = vmatmul.f32.gmra.mxu0 %v52
    %v1334 = vpop.f32.mrf.mxu0
    %v1335 = vadd.f32 0.0, %v1334
    %1336 = vmatmul.f32.gmra.mxu0 %v55
    %v1337 = vpop.f32.mrf.mxu0
    %v1338 = vadd.f32 0.0, %v1337
    %1339 = vmatmul.f32.gmra.mxu0 %v58
    %v1340 = vpop.f32.mrf.mxu0
    %v1341 = vadd.f32 0.0, %v1340
    %1342 = vmatmul.f32.gmra.mxu0 %v61
    %v1343 = vpop.f32.mrf.mxu0
    %v1344 = vadd.f32 0.0, %v1343
    %1345 = vmatmul.f32.gmra.mxu0 %v64
    %v1346 = vpop.f32.mrf.mxu0
    %v1347 = vadd.f32 0.0, %v1346
    %1348 = vmatmul.f32.gmra.mxu0 %v67
    %v1349 = vpop.f32.mrf.mxu0
    %v1350 = vadd.f32 0.0, %v1349
    %1351 = vdwg.mxu0
    %1352 = vmatpush.msra.mxu0 %v1261
    %1353 = vmatpush.msra.mxu0 %v1259
    %1354 = vmatpush.msra.mxu0 %v1257
    %1355 = vmatpush.msra.mxu0 %v1255
    %1356 = vmatpush.msra.mxu0 %v1253
    %1357 = vmatpush.msra.mxu0 %v1251
    %1358 = vmatpush.msra.mxu0 %v1249
    %1359 = vmatpush.msra.mxu0 %v1247
    %1360 = vmatpush.msra.mxu0 %v1245
    %1361 = vmatpush.msra.mxu0 %v1243
    %1362 = vmatpush.msra.mxu0 %v1241
    %1363 = vmatpush.msra.mxu0 %v1239
    %1364 = vmatpush.msra.mxu0 %v1237
    %1365 = vmatpush.msra.mxu0 %v1235
    %1366 = vmatpush.msra.mxu0 %v1233
    %1367 = vmatpush.msra.mxu0 %v1231
    %1368 = vmatmul.f32.gmra.mxu0 %v23
    %v1369 = vpop.f32.mrf.mxu0
    %v1370 = vadd.f32 %v1305, %v1369
    %1371 = vmatmul.f32.gmra.mxu0 %v26
    %v1372 = vpop.f32.mrf.mxu0
    %v1373 = vadd.f32 %v1308, %v1372
    %1374 = vmatmul.f32.gmra.mxu0 %v29
    %v1375 = vpop.f32.mrf.mxu0
    %v1376 = vadd.f32 %v1311, %v1375
    %1377 = vmatmul.f32.gmra.mxu0 %v32
    %v1378 = vpop.f32.mrf.mxu0
    %v1379 = vadd.f32 %v1314, %v1378
    %1380 = vmatmul.f32.gmra.mxu0 %v35
    %v1381 = vpop.f32.mrf.mxu0
    %v1382 = vadd.f32 %v1317, %v1381
    %1383 = vmatmul.f32.gmra.mxu0 %v38
    %v1384 = vpop.f32.mrf.mxu0
    %v1385 = vadd.f32 %v1320, %v1384
    %1386 = vmatmul.f32.gmra.mxu0 %v41
    %v1387 = vpop.f32.mrf.mxu0
    %v1388 = vadd.f32 %v1323, %v1387
    %1389 = vmatmul.f32.gmra.mxu0 %v44
    %v1390 = vpop.f32.mrf.mxu0
    %v1391 = vadd.f32 %v1326, %v1390
    %1392 = vmatmul.f32.gmra.mxu0 %v47
    %v1393 = vpop.f32.mrf.mxu0
    %v1394 = vadd.f32 %v1329, %v1393
    %1395 = vmatmul.f32.gmra.mxu0 %v50
    %v1396 = vpop.f32.mrf.mxu0
    %v1397 = vadd.f32 %v1332, %v1396
    %1398 = vmatmul.f32.gmra.mxu0 %v53
    %v1399 = vpop.f32.mrf.mxu0
    %v1400 = vadd.f32 %v1335, %v1399
    %1401 = vmatmul.f32.gmra.mxu0 %v56
    %v1402 = vpop.f32.mrf.mxu0
    %v1403 = vadd.f32 %v1338, %v1402
    %1404 = vmatmul.f32.gmra.mxu0 %v59
    %v1405 = vpop.f32.mrf.mxu0
    %v1406 = vadd.f32 %v1341, %v1405
    %1407 = vmatmul.f32.gmra.mxu0 %v62
    %v1408 = vpop.f32.mrf.mxu0
    %v1409 = vadd.f32 %v1344, %v1408
    %1410 = vmatmul.f32.gmra.mxu0 %v65
    %v1411 = vpop.f32.mrf.mxu0
    %v1412 = vadd.f32 %v1347, %v1411
    %1413 = vmatmul.f32.gmra.mxu0 %v68
    %v1414 = vpop.f32.mrf.mxu0
    %v1415 = vadd.f32 %v1350, %v1414
    %1416 = vdwg.mxu0
    %1417 = vmatpush.msra.mxu0 0.0
    %1418 = vmatpush.msra.mxu0 0.0
    %1419 = vmatpush.msra.mxu0 0.0
    %1420 = vmatpush.msra.mxu0 0.0
    %1421 = vmatpush.msra.mxu0 0.0
    %1422 = vmatpush.msra.mxu0 0.0
    %1423 = vmatpush.msra.mxu0 0.0
    %1424 = vmatpush.msra.mxu0 %v1282
    %1425 = vmatpush.msra.mxu0 %v1277
    %1426 = vmatpush.msra.mxu0 %v1275
    %1427 = vmatpush.msra.mxu0 %v1273
    %1428 = vmatpush.msra.mxu0 %v1271
    %1429 = vmatpush.msra.mxu0 %v1269
    %1430 = vmatpush.msra.mxu0 %v1267
    %1431 = vmatpush.msra.mxu0 %v1265
    %1432 = vmatpush.msra.mxu0 %v1263
    %1433 = vmatmul.f32.gmra.mxu0 %v178
    %v1434 = vpop.f32.mrf.mxu0
    %v1435 = vadd.f32 %v1370, %v1434
    %1436 = vmatmul.f32.gmra.mxu0 %v181
    %v1437 = vpop.f32.mrf.mxu0
    %v1438 = vadd.f32 %v1373, %v1437
    %1439 = vmatmul.f32.gmra.mxu0 %v184
    %v1440 = vpop.f32.mrf.mxu0
    %v1441 = vadd.f32 %v1376, %v1440
    %1442 = vmatmul.f32.gmra.mxu0 %v187
    %v1443 = vpop.f32.mrf.mxu0
    %v1444 = vadd.f32 %v1379, %v1443
    %1445 = vmatmul.f32.gmra.mxu0 %v190
    %v1446 = vpop.f32.mrf.mxu0
    %v1447 = vadd.f32 %v1382, %v1446
    %1448 = vmatmul.f32.gmra.mxu0 %v193
    %v1449 = vpop.f32.mrf.mxu0
    %v1450 = vadd.f32 %v1385, %v1449
    %1451 = vmatmul.f32.gmra.mxu0 %v196
    %v1452 = vpop.f32.mrf.mxu0
    %v1453 = vadd.f32 %v1388, %v1452
    %1454 = vmatmul.f32.gmra.mxu0 %v199
    %v1455 = vpop.f32.mrf.mxu0
    %v1456 = vadd.f32 %v1391, %v1455
    %1457 = vmatmul.f32.gmra.mxu0 %v202
    %v1458 = vpop.f32.mrf.mxu0
    %v1459 = vadd.f32 %v1394, %v1458
    %1460 = vmatmul.f32.gmra.mxu0 %v205
    %v1461 = vpop.f32.mrf.mxu0
    %v1462 = vadd.f32 %v1397, %v1461
    %1463 = vmatmul.f32.gmra.mxu0 %v208
    %v1464 = vpop.f32.mrf.mxu0
    %v1465 = vadd.f32 %v1400, %v1464
    %1466 = vmatmul.f32.gmra.mxu0 %v211
    %v1467 = vpop.f32.mrf.mxu0
    %v1468 = vadd.f32 %v1403, %v1467
    %1469 = vmatmul.f32.gmra.mxu0 %v214
    %v1470 = vpop.f32.mrf.mxu0
    %v1471 = vadd.f32 %v1406, %v1470
    %1472 = vmatmul.f32.gmra.mxu0 %v217
    %v1473 = vpop.f32.mrf.mxu0
    %v1474 = vadd.f32 %v1409, %v1473
    %1475 = vmatmul.f32.gmra.mxu0 %v220
    %v1476 = vpop.f32.mrf.mxu0
    %v1477 = vadd.f32 %v1412, %v1476
    %1478 = vmatmul.f32.gmra.mxu0 %v223
    %v1479 = vpop.f32.mrf.mxu0
    %v1480 = vadd.f32 %v1415, %v1479
    %1481 = vdwg.mxu0
    %1482 = vmatpush.msra.mxu0 %v1230
    %1483 = vmatpush.msra.mxu0 %v1228
    %1484 = vmatpush.msra.mxu0 %v1226
    %1485 = vmatpush.msra.mxu0 %v1224
    %1486 = vmatpush.msra.mxu0 %v1222
    %1487 = vmatpush.msra.mxu0 %v1220
    %1488 = vmatpush.msra.mxu0 %v1218
    %1489 = vmatpush.msra.mxu0 %v1216
    %1490 = vmatpush.msra.mxu0 %v1214
    %1491 = vmatpush.msra.mxu0 %v1212
    %1492 = vmatpush.msra.mxu0 %v1210
    %1493 = vmatpush.msra.mxu0 %v1208
    %1494 = vmatpush.msra.mxu0 %v1206
    %1495 = vmatpush.msra.mxu0 %v1204
    %1496 = vmatpush.msra.mxu0 %v1202
    %1497 = vmatpush.msra.mxu0 %v1200
    %1498 = vmatmul.f32.gmra.mxu0 %v22
    %v1499 = vpop.f32.mrf.mxu0
    %v1500 = vadd.f32 0.0, %v1499
    %1501 = vmatmul.f32.gmra.mxu0 %v25
    %v1502 = vpop.f32.mrf.mxu0
    %v1503 = vadd.f32 0.0, %v1502
    %1504 = vmatmul.f32.gmra.mxu0 %v28
    %v1505 = vpop.f32.mrf.mxu0
    %v1506 = vadd.f32 0.0, %v1505
    %1507 = vmatmul.f32.gmra.mxu0 %v31
    %v1508 = vpop.f32.mrf.mxu0
    %v1509 = vadd.f32 0.0, %v1508
    %1510 = vmatmul.f32.gmra.mxu0 %v34
    %v1511 = vpop.f32.mrf.mxu0
    %v1512 = vadd.f32 0.0, %v1511
    %1513 = vmatmul.f32.gmra.mxu0 %v37
    %v1514 = vpop.f32.mrf.mxu0
    %v1515 = vadd.f32 0.0, %v1514
    %1516 = vmatmul.f32.gmra.mxu0 %v40
    %v1517 = vpop.f32.mrf.mxu0
    %v1518 = vadd.f32 0.0, %v1517
    %1519 = vmatmul.f32.gmra.mxu0 %v43
    %v1520 = vpop.f32.mrf.mxu0
    %v1521 = vadd.f32 0.0, %v1520
    %1522 = vmatmul.f32.gmra.mxu0 %v46
    %v1523 = vpop.f32.mrf.mxu0
    %v1524 = vadd.f32 0.0, %v1523
    %1525 = vmatmul.f32.gmra.mxu0 %v49
    %v1526 = vpop.f32.mrf.mxu0
    %v1527 = vadd.f32 0.0, %v1526
    %1528 = vmatmul.f32.gmra.mxu0 %v52
    %v1529 = vpop.f32.mrf.mxu0
    %v1530 = vadd.f32 0.0, %v1529
    %1531 = vmatmul.f32.gmra.mxu0 %v55
    %v1532 = vpop.f32.mrf.mxu0
    %v1533 = vadd.f32 0.0, %v1532
    %1534 = vmatmul.f32.gmra.mxu0 %v58
    %v1535 = vpop.f32.mrf.mxu0
    %v1536 = vadd.f32 0.0, %v1535
    %1537 = vmatmul.f32.gmra.mxu0 %v61
    %v1538 = vpop.f32.mrf.mxu0
    %v1539 = vadd.f32 0.0, %v1538
    %1540 = vmatmul.f32.gmra.mxu0 %v64
    %v1541 = vpop.f32.mrf.mxu0
    %v1542 = vadd.f32 0.0, %v1541
    %1543 = vmatmul.f32.gmra.mxu0 %v67
    %v1544 = vpop.f32.mrf.mxu0
    %v1545 = vadd.f32 0.0, %v1544
    %1546 = vdwg.mxu0
    %1547 = vmatpush.msra.mxu0 %v1262
    %1548 = vmatpush.msra.mxu0 %v1260
    %1549 = vmatpush.msra.mxu0 %v1258
    %1550 = vmatpush.msra.mxu0 %v1256
    %1551 = vmatpush.msra.mxu0 %v1254
    %1552 = vmatpush.msra.mxu0 %v1252
    %1553 = vmatpush.msra.mxu0 %v1250
    %1554 = vmatpush.msra.mxu0 %v1248
    %1555 = vmatpush.msra.mxu0 %v1246
    %1556 = vmatpush.msra.mxu0 %v1244
    %1557 = vmatpush.msra.mxu0 %v1242
    %1558 = vmatpush.msra.mxu0 %v1240
    %1559 = vmatpush.msra.mxu0 %v1238
    %1560 = vmatpush.msra.mxu0 %v1236
    %1561 = vmatpush.msra.mxu0 %v1234
    %1562 = vmatpush.msra.mxu0 %v1232
    %1563 = vmatmul.f32.gmra.mxu0 %v23
    %v1564 = vpop.f32.mrf.mxu0
    %v1565 = vadd.f32 %v1500, %v1564
    %1566 = vmatmul.f32.gmra.mxu0 %v26
    %v1567 = vpop.f32.mrf.mxu0
    %v1568 = vadd.f32 %v1503, %v1567
    %1569 = vmatmul.f32.gmra.mxu0 %v29
    %v1570 = vpop.f32.mrf.mxu0
    %v1571 = vadd.f32 %v1506, %v1570
    %1572 = vmatmul.f32.gmra.mxu0 %v32
    %v1573 = vpop.f32.mrf.mxu0
    %v1574 = vadd.f32 %v1509, %v1573
    %1575 = vmatmul.f32.gmra.mxu0 %v35
    %v1576 = vpop.f32.mrf.mxu0
    %v1577 = vadd.f32 %v1512, %v1576
    %1578 = vmatmul.f32.gmra.mxu0 %v38
    %v1579 = vpop.f32.mrf.mxu0
    %v1580 = vadd.f32 %v1515, %v1579
    %1581 = vmatmul.f32.gmra.mxu0 %v41
    %v1582 = vpop.f32.mrf.mxu0
    %v1583 = vadd.f32 %v1518, %v1582
    %1584 = vmatmul.f32.gmra.mxu0 %v44
    %v1585 = vpop.f32.mrf.mxu0
    %v1586 = vadd.f32 %v1521, %v1585
    %1587 = vmatmul.f32.gmra.mxu0 %v47
    %v1588 = vpop.f32.mrf.mxu0
    %v1589 = vadd.f32 %v1524, %v1588
    %1590 = vmatmul.f32.gmra.mxu0 %v50
    %v1591 = vpop.f32.mrf.mxu0
    %v1592 = vadd.f32 %v1527, %v1591
    %1593 = vmatmul.f32.gmra.mxu0 %v53
    %v1594 = vpop.f32.mrf.mxu0
    %v1595 = vadd.f32 %v1530, %v1594
    %1596 = vmatmul.f32.gmra.mxu0 %v56
    %v1597 = vpop.f32.mrf.mxu0
    %v1598 = vadd.f32 %v1533, %v1597
    %1599 = vmatmul.f32.gmra.mxu0 %v59
    %v1600 = vpop.f32.mrf.mxu0
    %v1601 = vadd.f32 %v1536, %v1600
    %1602 = vmatmul.f32.gmra.mxu0 %v62
    %v1603 = vpop.f32.mrf.mxu0
    %v1604 = vadd.f32 %v1539, %v1603
    %1605 = vmatmul.f32.gmra.mxu0 %v65
    %v1606 = vpop.f32.mrf.mxu0
    %v1607 = vadd.f32 %v1542, %v1606
    %1608 = vmatmul.f32.gmra.mxu0 %v68
    %v1609 = vpop.f32.mrf.mxu0
    %v1610 = vadd.f32 %v1545, %v1609
    %1611 = vdwg.mxu0
    %1612 = vmatpush.msra.mxu0 0.0
    %1613 = vmatpush.msra.mxu0 0.0
    %1614 = vmatpush.msra.mxu0 0.0
    %1615 = vmatpush.msra.mxu0 0.0
    %1616 = vmatpush.msra.mxu0 0.0
    %1617 = vmatpush.msra.mxu0 0.0
    %1618 = vmatpush.msra.mxu0 0.0
    %1619 = vmatpush.msra.mxu0 %v1285
    %1620 = vmatpush.msra.mxu0 %v1278
    %1621 = vmatpush.msra.mxu0 %v1276
    %1622 = vmatpush.msra.mxu0 %v1274
    %1623 = vmatpush.msra.mxu0 %v1272
    %1624 = vmatpush.msra.mxu0 %v1270
    %1625 = vmatpush.msra.mxu0 %v1268
    %1626 = vmatpush.msra.mxu0 %v1266
    %1627 = vmatpush.msra.mxu0 %v1264
    %1628 = vmatmul.f32.gmra.mxu0 %v178
    %v1629 = vpop.f32.mrf.mxu0
    %v1630 = vadd.f32 %v1565, %v1629
    %1631 = vmatmul.f32.gmra.mxu0 %v181
    %v1632 = vpop.f32.mrf.mxu0
    %v1633 = vadd.f32 %v1568, %v1632
    %1634 = vmatmul.f32.gmra.mxu0 %v184
    %v1635 = vpop.f32.mrf.mxu0
    %v1636 = vadd.f32 %v1571, %v1635
    %1637 = vmatmul.f32.gmra.mxu0 %v187
    %v1638 = vpop.f32.mrf.mxu0
    %v1639 = vadd.f32 %v1574, %v1638
    %1640 = vmatmul.f32.gmra.mxu0 %v190
    %v1641 = vpop.f32.mrf.mxu0
    %v1642 = vadd.f32 %v1577, %v1641
    %1643 = vmatmul.f32.gmra.mxu0 %v193
    %v1644 = vpop.f32.mrf.mxu0
    %v1645 = vadd.f32 %v1580, %v1644
    %1646 = vmatmul.f32.gmra.mxu0 %v196
    %v1647 = vpop.f32.mrf.mxu0
    %v1648 = vadd.f32 %v1583, %v1647
    %1649 = vmatmul.f32.gmra.mxu0 %v199
    %v1650 = vpop.f32.mrf.mxu0
    %v1651 = vadd.f32 %v1586, %v1650
    %1652 = vmatmul.f32.gmra.mxu0 %v202
    %v1653 = vpop.f32.mrf.mxu0
    %v1654 = vadd.f32 %v1589, %v1653
    %1655 = vmatmul.f32.gmra.mxu0 %v205
    %v1656 = vpop.f32.mrf.mxu0
    %v1657 = vadd.f32 %v1592, %v1656
    %1658 = vmatmul.f32.gmra.mxu0 %v208
    %v1659 = vpop.f32.mrf.mxu0
    %v1660 = vadd.f32 %v1595, %v1659
    %1661 = vmatmul.f32.gmra.mxu0 %v211
    %v1662 = vpop.f32.mrf.mxu0
    %v1663 = vadd.f32 %v1598, %v1662
    %1664 = vmatmul.f32.gmra.mxu0 %v214
    %v1665 = vpop.f32.mrf.mxu0
    %v1666 = vadd.f32 %v1601, %v1665
    %1667 = vmatmul.f32.gmra.mxu0 %v217
    %v1668 = vpop.f32.mrf.mxu0
    %v1669 = vadd.f32 %v1604, %v1668
    %1670 = vmatmul.f32.gmra.mxu0 %v220
    %v1671 = vpop.f32.mrf.mxu0
    %v1672 = vadd.f32 %v1607, %v1671
    %1673 = vmatmul.f32.gmra.mxu0 %v223
    %v1674 = vpop.f32.mrf.mxu0
    %v1675 = vadd.f32 %v1610, %v1674
    %1676 = vdwg.mxu0
    %s1677 = scalar_lea.vmem %s1, 64
    %v1678 = vld [vmem:[%s1677] sm:$0xff]
    %v1679 = vld [vmem:[%s1677 + $0x8] sm:$0xff]
    %v1680 = vld [vmem:[%s1677 + $0x10] sm:$0xff]
    %v1681 = vld [vmem:[%s1677 + $0x18] sm:$0xff]
    %v1682 = vld [vmem:[%s1677 + $0x20] sm:$0xff]
    %v1683 = vld [vmem:[%s1677 + $0x28] sm:$0xff]
    %v1684 = vld [vmem:[%s1677 + $0x30] sm:$0xff]
    %v1685 = vld [vmem:[%s1677 + $0x38] sm:$0xff]
    %v1686 = vmul.f32 %v70, %v1678
    %v1687 = vmul.f32 %v71, %v1679
    %v1688 = vmul.f32 %v72, %v1680
    %v1689 = vmul.f32 %v73, %v1681
    %v1690 = vmul.f32 %v74, %v1682
    %v1691 = vmul.f32 %v75, %v1683
    %v1692 = vmul.f32 %v76, %v1684
    %v1693 = vmul.f32 %v77, %v1685
    %v1694 = vadd.f32 %v1435, %v1686
    %v1695 = vadd.f32 %v1630, %v1687
    %v1696 = vadd.f32 %v1438, %v1688
    %v1697 = vadd.f32 %v1633, %v1689
    %v1698 = vadd.f32 %v1441, %v1690
    %v1699 = vadd.f32 %v1636, %v1691
    %v1700 = vadd.f32 %v1444, %v1692
    %v1701 = vadd.f32 %v1639, %v1693
    %v1702 = vxor.u32 %v1694, 2147483648
    %v1703 = vxor.u32 %v1695, 2147483648
    %v1704 = vxor.u32 %v1696, 2147483648
    %v1705 = vxor.u32 %v1697, 2147483648
    %v1706 = vxor.u32 %v1698, 2147483648
    %v1707 = vxor.u32 %v1699, 2147483648
    %v1708 = vxor.u32 %v1700, 2147483648
    %v1709 = vxor.u32 %v1701, 2147483648
    %v1710 = vmul.f32 %v1702, 1.442695
    %v1711 = vpow.pop %v1710
    %v1712 = vmul.f32 %v1703, 1.442695
    %v1713 = vpow.pop %v1712
    %v1714 = vmul.f32 %v1704, 1.442695
    %v1715 = vpow.pop %v1714
    %v1716 = vmul.f32 %v1705, 1.442695
    %v1717 = vpow.pop %v1716
    %v1718 = vmul.f32 %v1706, 1.442695
    %v1719 = vpow.pop %v1718
    %v1720 = vmul.f32 %v1707, 1.442695
    %v1721 = vpow.pop %v1720
    %v1722 = vmul.f32 %v1708, 1.442695
    %v1723 = vpow.pop %v1722
    %v1724 = vmul.f32 %v1709, 1.442695
    %v1725 = vpow.pop %v1724
    %v1726 = vadd.f32 %v1711, 1.0
    %v1727 = vadd.f32 %v1713, 1.0
    %v1728 = vadd.f32 %v1715, 1.0
    %v1729 = vadd.f32 %v1717, 1.0
    %v1730 = vadd.f32 %v1719, 1.0
    %v1731 = vadd.f32 %v1721, 1.0
    %v1732 = vadd.f32 %v1723, 1.0
    %v1733 = vadd.f32 %v1725, 1.0
    %v1734 = vrcp.pop %v1726
    %v1735 = vmul.f32 %v1726, %v1734
    %v1736 = vsub.f32 1.0, %v1735
    %v1737 = vmul.f32 %v1734, %v1736
    %v1738 = vadd.f32 %v1734, %v1737
    %vm1739 = vweird.f32 %v1726
    %vm1740 = vweird.f32 %v1734
    %vm1741 = vmor %vm1739, %vm1740
    %v1742 = vsel %vm1741, %v1734, %v1738
    %v1743 = vand.u32 2147483647, %v1726
    %vm1744 = vcmp.eq.f32.partialorder %v1743, 8.507059e+37
    %v1745 = vand.u32 %v1726, 2147483648
    %v1746 = vor.u32 1.1754944e-38, %v1745
    %v1747 = vsel %vm1744, %v1746, %v1742
    %v1748 = vmul.f32 1.0, %v1747
    %v1749 = vrcp.pop %v1727
    %v1750 = vmul.f32 %v1727, %v1749
    %v1751 = vsub.f32 1.0, %v1750
    %v1752 = vmul.f32 %v1749, %v1751
    %v1753 = vadd.f32 %v1749, %v1752
    %vm1754 = vweird.f32 %v1727
    %vm1755 = vweird.f32 %v1749
    %vm1756 = vmor %vm1754, %vm1755
    %v1757 = vsel %vm1756, %v1749, %v1753
    %v1758 = vand.u32 2147483647, %v1727
    %vm1759 = vcmp.eq.f32.partialorder %v1758, 8.507059e+37
    %v1760 = vand.u32 %v1727, 2147483648
    %v1761 = vor.u32 1.1754944e-38, %v1760
    %v1762 = vsel %vm1759, %v1761, %v1757
    %v1763 = vmul.f32 1.0, %v1762
    %v1764 = vrcp.pop %v1728
    %v1765 = vmul.f32 %v1728, %v1764
    %v1766 = vsub.f32 1.0, %v1765
    %v1767 = vmul.f32 %v1764, %v1766
    %v1768 = vadd.f32 %v1764, %v1767
    %vm1769 = vweird.f32 %v1728
    %vm1770 = vweird.f32 %v1764
    %vm1771 = vmor %vm1769, %vm1770
    %v1772 = vsel %vm1771, %v1764, %v1768
    %v1773 = vand.u32 2147483647, %v1728
    %vm1774 = vcmp.eq.f32.partialorder %v1773, 8.507059e+37
    %v1775 = vand.u32 %v1728, 2147483648
    %v1776 = vor.u32 1.1754944e-38, %v1775
    %v1777 = vsel %vm1774, %v1776, %v1772
    %v1778 = vmul.f32 1.0, %v1777
    %v1779 = vrcp.pop %v1729
    %v1780 = vmul.f32 %v1729, %v1779
    %v1781 = vsub.f32 1.0, %v1780
    %v1782 = vmul.f32 %v1779, %v1781
    %v1783 = vadd.f32 %v1779, %v1782
    %vm1784 = vweird.f32 %v1729
    %vm1785 = vweird.f32 %v1779
    %vm1786 = vmor %vm1784, %vm1785
    %v1787 = vsel %vm1786, %v1779, %v1783
    %v1788 = vand.u32 2147483647, %v1729
    %vm1789 = vcmp.eq.f32.partialorder %v1788, 8.507059e+37
    %v1790 = vand.u32 %v1729, 2147483648
    %v1791 = vor.u32 1.1754944e-38, %v1790
    %v1792 = vsel %vm1789, %v1791, %v1787
    %v1793 = vmul.f32 1.0, %v1792
    %v1794 = vrcp.pop %v1730
    %v1795 = vmul.f32 %v1730, %v1794
    %v1796 = vsub.f32 1.0, %v1795
    %v1797 = vmul.f32 %v1794, %v1796
    %v1798 = vadd.f32 %v1794, %v1797
    %vm1799 = vweird.f32 %v1730
    %vm1800 = vweird.f32 %v1794
    %vm1801 = vmor %vm1799, %vm1800
    %v1802 = vsel %vm1801, %v1794, %v1798
    %v1803 = vand.u32 2147483647, %v1730
    %vm1804 = vcmp.eq.f32.partialorder %v1803, 8.507059e+37
    %v1805 = vand.u32 %v1730, 2147483648
    %v1806 = vor.u32 1.1754944e-38, %v1805
    %v1807 = vsel %vm1804, %v1806, %v1802
    %v1808 = vmul.f32 1.0, %v1807
    %v1809 = vrcp.pop %v1731
    %v1810 = vmul.f32 %v1731, %v1809
    %v1811 = vsub.f32 1.0, %v1810
    %v1812 = vmul.f32 %v1809, %v1811
    %v1813 = vadd.f32 %v1809, %v1812
    %vm1814 = vweird.f32 %v1731
    %vm1815 = vweird.f32 %v1809
    %vm1816 = vmor %vm1814, %vm1815
    %v1817 = vsel %vm1816, %v1809, %v1813
    %v1818 = vand.u32 2147483647, %v1731
    %vm1819 = vcmp.eq.f32.partialorder %v1818, 8.507059e+37
    %v1820 = vand.u32 %v1731, 2147483648
    %v1821 = vor.u32 1.1754944e-38, %v1820
    %v1822 = vsel %vm1819, %v1821, %v1817
    %v1823 = vmul.f32 1.0, %v1822
    %v1824 = vrcp.pop %v1732
    %v1825 = vmul.f32 %v1732, %v1824
    %v1826 = vsub.f32 1.0, %v1825
    %v1827 = vmul.f32 %v1824, %v1826
    %v1828 = vadd.f32 %v1824, %v1827
    %vm1829 = vweird.f32 %v1732
    %vm1830 = vweird.f32 %v1824
    %vm1831 = vmor %vm1829, %vm1830
    %v1832 = vsel %vm1831, %v1824, %v1828
    %v1833 = vand.u32 2147483647, %v1732
    %vm1834 = vcmp.eq.f32.partialorder %v1833, 8.507059e+37
    %v1835 = vand.u32 %v1732, 2147483648
    %v1836 = vor.u32 1.1754944e-38, %v1835
    %v1837 = vsel %vm1834, %v1836, %v1832
    %v1838 = vmul.f32 1.0, %v1837
    %v1839 = vrcp.pop %v1733
    %v1840 = vmul.f32 %v1733, %v1839
    %v1841 = vsub.f32 1.0, %v1840
    %v1842 = vmul.f32 %v1839, %v1841
    %v1843 = vadd.f32 %v1839, %v1842
    %vm1844 = vweird.f32 %v1733
    %vm1845 = vweird.f32 %v1839
    %vm1846 = vmor %vm1844, %vm1845
    %v1847 = vsel %vm1846, %v1839, %v1843
    %v1848 = vand.u32 2147483647, %v1733
    %vm1849 = vcmp.eq.f32.partialorder %v1848, 8.507059e+37
    %v1850 = vand.u32 %v1733, 2147483648
    %v1851 = vor.u32 1.1754944e-38, %v1850
    %v1852 = vsel %vm1849, %v1851, %v1847
    %v1853 = vmul.f32 1.0, %v1852
    %v1854 = vmul.f32 %v78, %v1678
    %v1855 = vmul.f32 %v79, %v1679
    %v1856 = vmul.f32 %v80, %v1680
    %v1857 = vmul.f32 %v81, %v1681
    %v1858 = vmul.f32 %v82, %v1682
    %v1859 = vmul.f32 %v83, %v1683
    %v1860 = vmul.f32 %v84, %v1684
    %v1861 = vmul.f32 %v85, %v1685
    %v1862 = vadd.f32 %v1447, %v1854
    %v1863 = vadd.f32 %v1642, %v1855
    %v1864 = vadd.f32 %v1450, %v1856
    %v1865 = vadd.f32 %v1645, %v1857
    %v1866 = vadd.f32 %v1453, %v1858
    %v1867 = vadd.f32 %v1648, %v1859
    %v1868 = vadd.f32 %v1456, %v1860
    %v1869 = vadd.f32 %v1651, %v1861
    %v1870 = vxor.u32 %v1862, 2147483648
    %v1871 = vxor.u32 %v1863, 2147483648
    %v1872 = vxor.u32 %v1864, 2147483648
    %v1873 = vxor.u32 %v1865, 2147483648
    %v1874 = vxor.u32 %v1866, 2147483648
    %v1875 = vxor.u32 %v1867, 2147483648
    %v1876 = vxor.u32 %v1868, 2147483648
    %v1877 = vxor.u32 %v1869, 2147483648
    %v1878 = vmul.f32 %v1870, 1.442695
    %v1879 = vpow.pop %v1878
    %v1880 = vmul.f32 %v1871, 1.442695
    %v1881 = vpow.pop %v1880
    %v1882 = vmul.f32 %v1872, 1.442695
    %v1883 = vpow.pop %v1882
    %v1884 = vmul.f32 %v1873, 1.442695
    %v1885 = vpow.pop %v1884
    %v1886 = vmul.f32 %v1874, 1.442695
    %v1887 = vpow.pop %v1886
    %v1888 = vmul.f32 %v1875, 1.442695
    %v1889 = vpow.pop %v1888
    %v1890 = vmul.f32 %v1876, 1.442695
    %v1891 = vpow.pop %v1890
    %v1892 = vmul.f32 %v1877, 1.442695
    %v1893 = vpow.pop %v1892
    %v1894 = vadd.f32 %v1879, 1.0
    %v1895 = vadd.f32 %v1881, 1.0
    %v1896 = vadd.f32 %v1883, 1.0
    %v1897 = vadd.f32 %v1885, 1.0
    %v1898 = vadd.f32 %v1887, 1.0
    %v1899 = vadd.f32 %v1889, 1.0
    %v1900 = vadd.f32 %v1891, 1.0
    %v1901 = vadd.f32 %v1893, 1.0
    %v1902 = vrcp.pop %v1894
    %v1903 = vmul.f32 %v1894, %v1902
    %v1904 = vsub.f32 1.0, %v1903
    %v1905 = vmul.f32 %v1902, %v1904
    %v1906 = vadd.f32 %v1902, %v1905
    %vm1907 = vweird.f32 %v1894
    %vm1908 = vweird.f32 %v1902
    %vm1909 = vmor %vm1907, %vm1908
    %v1910 = vsel %vm1909, %v1902, %v1906
    %v1911 = vand.u32 2147483647, %v1894
    %vm1912 = vcmp.eq.f32.partialorder %v1911, 8.507059e+37
    %v1913 = vand.u32 %v1894, 2147483648
    %v1914 = vor.u32 1.1754944e-38, %v1913
    %v1915 = vsel %vm1912, %v1914, %v1910
    %v1916 = vmul.f32 1.0, %v1915
    %v1917 = vrcp.pop %v1895
    %v1918 = vmul.f32 %v1895, %v1917
    %v1919 = vsub.f32 1.0, %v1918
    %v1920 = vmul.f32 %v1917, %v1919
    %v1921 = vadd.f32 %v1917, %v1920
    %vm1922 = vweird.f32 %v1895
    %vm1923 = vweird.f32 %v1917
    %vm1924 = vmor %vm1922, %vm1923
    %v1925 = vsel %vm1924, %v1917, %v1921
    %v1926 = vand.u32 2147483647, %v1895
    %vm1927 = vcmp.eq.f32.partialorder %v1926, 8.507059e+37
    %v1928 = vand.u32 %v1895, 2147483648
    %v1929 = vor.u32 1.1754944e-38, %v1928
    %v1930 = vsel %vm1927, %v1929, %v1925
    %v1931 = vmul.f32 1.0, %v1930
    %v1932 = vrcp.pop %v1896
    %v1933 = vmul.f32 %v1896, %v1932
    %v1934 = vsub.f32 1.0, %v1933
    %v1935 = vmul.f32 %v1932, %v1934
    %v1936 = vadd.f32 %v1932, %v1935
    %vm1937 = vweird.f32 %v1896
    %vm1938 = vweird.f32 %v1932
    %vm1939 = vmor %vm1937, %vm1938
    %v1940 = vsel %vm1939, %v1932, %v1936
    %v1941 = vand.u32 2147483647, %v1896
    %vm1942 = vcmp.eq.f32.partialorder %v1941, 8.507059e+37
    %v1943 = vand.u32 %v1896, 2147483648
    %v1944 = vor.u32 1.1754944e-38, %v1943
    %v1945 = vsel %vm1942, %v1944, %v1940
    %v1946 = vmul.f32 1.0, %v1945
    %v1947 = vrcp.pop %v1897
    %v1948 = vmul.f32 %v1897, %v1947
    %v1949 = vsub.f32 1.0, %v1948
    %v1950 = vmul.f32 %v1947, %v1949
    %v1951 = vadd.f32 %v1947, %v1950
    %vm1952 = vweird.f32 %v1897
    %vm1953 = vweird.f32 %v1947
    %vm1954 = vmor %vm1952, %vm1953
    %v1955 = vsel %vm1954, %v1947, %v1951
    %v1956 = vand.u32 2147483647, %v1897
    %vm1957 = vcmp.eq.f32.partialorder %v1956, 8.507059e+37
    %v1958 = vand.u32 %v1897, 2147483648
    %v1959 = vor.u32 1.1754944e-38, %v1958
    %v1960 = vsel %vm1957, %v1959, %v1955
    %v1961 = vmul.f32 1.0, %v1960
    %v1962 = vrcp.pop %v1898
    %v1963 = vmul.f32 %v1898, %v1962
    %v1964 = vsub.f32 1.0, %v1963
    %v1965 = vmul.f32 %v1962, %v1964
    %v1966 = vadd.f32 %v1962, %v1965
    %vm1967 = vweird.f32 %v1898
    %vm1968 = vweird.f32 %v1962
    %vm1969 = vmor %vm1967, %vm1968
    %v1970 = vsel %vm1969, %v1962, %v1966
    %v1971 = vand.u32 2147483647, %v1898
    %vm1972 = vcmp.eq.f32.partialorder %v1971, 8.507059e+37
    %v1973 = vand.u32 %v1898, 2147483648
    %v1974 = vor.u32 1.1754944e-38, %v1973
    %v1975 = vsel %vm1972, %v1974, %v1970
    %v1976 = vmul.f32 1.0, %v1975
    %v1977 = vrcp.pop %v1899
    %v1978 = vmul.f32 %v1899, %v1977
    %v1979 = vsub.f32 1.0, %v1978
    %v1980 = vmul.f32 %v1977, %v1979
    %v1981 = vadd.f32 %v1977, %v1980
    %vm1982 = vweird.f32 %v1899
    %vm1983 = vweird.f32 %v1977
    %vm1984 = vmor %vm1982, %vm1983
    %v1985 = vsel %vm1984, %v1977, %v1981
    %v1986 = vand.u32 2147483647, %v1899
    %vm1987 = vcmp.eq.f32.partialorder %v1986, 8.507059e+37
    %v1988 = vand.u32 %v1899, 2147483648
    %v1989 = vor.u32 1.1754944e-38, %v1988
    %v1990 = vsel %vm1987, %v1989, %v1985
    %v1991 = vmul.f32 1.0, %v1990
    %v1992 = vrcp.pop %v1900
    %v1993 = vmul.f32 %v1900, %v1992
    %v1994 = vsub.f32 1.0, %v1993
    %v1995 = vmul.f32 %v1992, %v1994
    %v1996 = vadd.f32 %v1992, %v1995
    %vm1997 = vweird.f32 %v1900
    %vm1998 = vweird.f32 %v1992
    %vm1999 = vmor %vm1997, %vm1998
    %v2000 = vsel %vm1999, %v1992, %v1996
    %v2001 = vand.u32 2147483647, %v1900
    %vm2002 = vcmp.eq.f32.partialorder %v2001, 8.507059e+37
    %v2003 = vand.u32 %v1900, 2147483648
    %v2004 = vor.u32 1.1754944e-38, %v2003
    %v2005 = vsel %vm2002, %v2004, %v2000
    %v2006 = vmul.f32 1.0, %v2005
    %v2007 = vrcp.pop %v1901
    %v2008 = vmul.f32 %v1901, %v2007
    %v2009 = vsub.f32 1.0, %v2008
    %v2010 = vmul.f32 %v2007, %v2009
    %v2011 = vadd.f32 %v2007, %v2010
    %vm2012 = vweird.f32 %v1901
    %vm2013 = vweird.f32 %v2007
    %vm2014 = vmor %vm2012, %vm2013
    %v2015 = vsel %vm2014, %v2007, %v2011
    %v2016 = vand.u32 2147483647, %v1901
    %vm2017 = vcmp.eq.f32.partialorder %v2016, 8.507059e+37
    %v2018 = vand.u32 %v1901, 2147483648
    %v2019 = vor.u32 1.1754944e-38, %v2018
    %v2020 = vsel %vm2017, %v2019, %v2015
    %v2021 = vmul.f32 1.0, %v2020
    %v2022 = vmul.f32 %v86, %v1678
    %v2023 = vmul.f32 %v87, %v1679
    %v2024 = vmul.f32 %v88, %v1680
    %v2025 = vmul.f32 %v89, %v1681
    %v2026 = vmul.f32 %v90, %v1682
    %v2027 = vmul.f32 %v91, %v1683
    %v2028 = vmul.f32 %v92, %v1684
    %v2029 = vmul.f32 %v93, %v1685
    %v2030 = vadd.f32 %v1459, %v2022
    %v2031 = vadd.f32 %v1654, %v2023
    %v2032 = vadd.f32 %v1462, %v2024
    %v2033 = vadd.f32 %v1657, %v2025
    %v2034 = vadd.f32 %v1465, %v2026
    %v2035 = vadd.f32 %v1660, %v2027
    %v2036 = vadd.f32 %v1468, %v2028
    %v2037 = vadd.f32 %v1663, %v2029
    %v2038 = vxor.u32 %v2030, 2147483648
    %v2039 = vxor.u32 %v2031, 2147483648
    %v2040 = vxor.u32 %v2032, 2147483648
    %v2041 = vxor.u32 %v2033, 2147483648
    %v2042 = vxor.u32 %v2034, 2147483648
    %v2043 = vxor.u32 %v2035, 2147483648
    %v2044 = vxor.u32 %v2036, 2147483648
    %v2045 = vxor.u32 %v2037, 2147483648
    %v2046 = vmul.f32 %v2038, 1.442695
    %v2047 = vpow.pop %v2046
    %v2048 = vmul.f32 %v2039, 1.442695
    %v2049 = vpow.pop %v2048
    %v2050 = vmul.f32 %v2040, 1.442695
    %v2051 = vpow.pop %v2050
    %v2052 = vmul.f32 %v2041, 1.442695
    %v2053 = vpow.pop %v2052
    %v2054 = vmul.f32 %v2042, 1.442695
    %v2055 = vpow.pop %v2054
    %v2056 = vmul.f32 %v2043, 1.442695
    %v2057 = vpow.pop %v2056
    %v2058 = vmul.f32 %v2044, 1.442695
    %v2059 = vpow.pop %v2058
    %v2060 = vmul.f32 %v2045, 1.442695
    %v2061 = vpow.pop %v2060
    %v2062 = vadd.f32 %v2047, 1.0
    %v2063 = vadd.f32 %v2049, 1.0
    %v2064 = vadd.f32 %v2051, 1.0
    %v2065 = vadd.f32 %v2053, 1.0
    %v2066 = vadd.f32 %v2055, 1.0
    %v2067 = vadd.f32 %v2057, 1.0
    %v2068 = vadd.f32 %v2059, 1.0
    %v2069 = vadd.f32 %v2061, 1.0
    %v2070 = vrcp.pop %v2062
    %v2071 = vmul.f32 %v2062, %v2070
    %v2072 = vsub.f32 1.0, %v2071
    %v2073 = vmul.f32 %v2070, %v2072
    %v2074 = vadd.f32 %v2070, %v2073
    %vm2075 = vweird.f32 %v2062
    %vm2076 = vweird.f32 %v2070
    %vm2077 = vmor %vm2075, %vm2076
    %v2078 = vsel %vm2077, %v2070, %v2074
    %v2079 = vand.u32 2147483647, %v2062
    %vm2080 = vcmp.eq.f32.partialorder %v2079, 8.507059e+37
    %v2081 = vand.u32 %v2062, 2147483648
    %v2082 = vor.u32 1.1754944e-38, %v2081
    %v2083 = vsel %vm2080, %v2082, %v2078
    %v2084 = vmul.f32 1.0, %v2083
    %v2085 = vrcp.pop %v2063
    %v2086 = vmul.f32 %v2063, %v2085
    %v2087 = vsub.f32 1.0, %v2086
    %v2088 = vmul.f32 %v2085, %v2087
    %v2089 = vadd.f32 %v2085, %v2088
    %vm2090 = vweird.f32 %v2063
    %vm2091 = vweird.f32 %v2085
    %vm2092 = vmor %vm2090, %vm2091
    %v2093 = vsel %vm2092, %v2085, %v2089
    %v2094 = vand.u32 2147483647, %v2063
    %vm2095 = vcmp.eq.f32.partialorder %v2094, 8.507059e+37
    %v2096 = vand.u32 %v2063, 2147483648
    %v2097 = vor.u32 1.1754944e-38, %v2096
    %v2098 = vsel %vm2095, %v2097, %v2093
    %v2099 = vmul.f32 1.0, %v2098
    %v2100 = vrcp.pop %v2064
    %v2101 = vmul.f32 %v2064, %v2100
    %v2102 = vsub.f32 1.0, %v2101
    %v2103 = vmul.f32 %v2100, %v2102
    %v2104 = vadd.f32 %v2100, %v2103
    %vm2105 = vweird.f32 %v2064
    %vm2106 = vweird.f32 %v2100
    %vm2107 = vmor %vm2105, %vm2106
    %v2108 = vsel %vm2107, %v2100, %v2104
    %v2109 = vand.u32 2147483647, %v2064
    %vm2110 = vcmp.eq.f32.partialorder %v2109, 8.507059e+37
    %v2111 = vand.u32 %v2064, 2147483648
    %v2112 = vor.u32 1.1754944e-38, %v2111
    %v2113 = vsel %vm2110, %v2112, %v2108
    %v2114 = vmul.f32 1.0, %v2113
    %v2115 = vrcp.pop %v2065
    %v2116 = vmul.f32 %v2065, %v2115
    %v2117 = vsub.f32 1.0, %v2116
    %v2118 = vmul.f32 %v2115, %v2117
    %v2119 = vadd.f32 %v2115, %v2118
    %vm2120 = vweird.f32 %v2065
    %vm2121 = vweird.f32 %v2115
    %vm2122 = vmor %vm2120, %vm2121
    %v2123 = vsel %vm2122, %v2115, %v2119
    %v2124 = vand.u32 2147483647, %v2065
    %vm2125 = vcmp.eq.f32.partialorder %v2124, 8.507059e+37
    %v2126 = vand.u32 %v2065, 2147483648
    %v2127 = vor.u32 1.1754944e-38, %v2126
    %v2128 = vsel %vm2125, %v2127, %v2123
    %v2129 = vmul.f32 1.0, %v2128
    %v2130 = vrcp.pop %v2066
    %v2131 = vmul.f32 %v2066, %v2130
    %v2132 = vsub.f32 1.0, %v2131
    %v2133 = vmul.f32 %v2130, %v2132
    %v2134 = vadd.f32 %v2130, %v2133
    %vm2135 = vweird.f32 %v2066
    %vm2136 = vweird.f32 %v2130
    %vm2137 = vmor %vm2135, %vm2136
    %v2138 = vsel %vm2137, %v2130, %v2134
    %v2139 = vand.u32 2147483647, %v2066
    %vm2140 = vcmp.eq.f32.partialorder %v2139, 8.507059e+37
    %v2141 = vand.u32 %v2066, 2147483648
    %v2142 = vor.u32 1.1754944e-38, %v2141
    %v2143 = vsel %vm2140, %v2142, %v2138
    %v2144 = vmul.f32 1.0, %v2143
    %v2145 = vrcp.pop %v2067
    %v2146 = vmul.f32 %v2067, %v2145
    %v2147 = vsub.f32 1.0, %v2146
    %v2148 = vmul.f32 %v2145, %v2147
    %v2149 = vadd.f32 %v2145, %v2148
    %vm2150 = vweird.f32 %v2067
    %vm2151 = vweird.f32 %v2145
    %vm2152 = vmor %vm2150, %vm2151
    %v2153 = vsel %vm2152, %v2145, %v2149
    %v2154 = vand.u32 2147483647, %v2067
    %vm2155 = vcmp.eq.f32.partialorder %v2154, 8.507059e+37
    %v2156 = vand.u32 %v2067, 2147483648
    %v2157 = vor.u32 1.1754944e-38, %v2156
    %v2158 = vsel %vm2155, %v2157, %v2153
    %v2159 = vmul.f32 1.0, %v2158
    %v2160 = vrcp.pop %v2068
    %v2161 = vmul.f32 %v2068, %v2160
    %v2162 = vsub.f32 1.0, %v2161
    %v2163 = vmul.f32 %v2160, %v2162
    %v2164 = vadd.f32 %v2160, %v2163
    %vm2165 = vweird.f32 %v2068
    %vm2166 = vweird.f32 %v2160
    %vm2167 = vmor %vm2165, %vm2166
    %v2168 = vsel %vm2167, %v2160, %v2164
    %v2169 = vand.u32 2147483647, %v2068
    %vm2170 = vcmp.eq.f32.partialorder %v2169, 8.507059e+37
    %v2171 = vand.u32 %v2068, 2147483648
    %v2172 = vor.u32 1.1754944e-38, %v2171
    %v2173 = vsel %vm2170, %v2172, %v2168
    %v2174 = vmul.f32 1.0, %v2173
    %v2175 = vrcp.pop %v2069
    %v2176 = vmul.f32 %v2069, %v2175
    %v2177 = vsub.f32 1.0, %v2176
    %v2178 = vmul.f32 %v2175, %v2177
    %v2179 = vadd.f32 %v2175, %v2178
    %vm2180 = vweird.f32 %v2069
    %vm2181 = vweird.f32 %v2175
    %vm2182 = vmor %vm2180, %vm2181
    %v2183 = vsel %vm2182, %v2175, %v2179
    %v2184 = vand.u32 2147483647, %v2069
    %vm2185 = vcmp.eq.f32.partialorder %v2184, 8.507059e+37
    %v2186 = vand.u32 %v2069, 2147483648
    %v2187 = vor.u32 1.1754944e-38, %v2186
    %v2188 = vsel %vm2185, %v2187, %v2183
    %v2189 = vmul.f32 1.0, %v2188
    %v2190 = vtanh.pop %v1471
    %v2191 = vtanh.pop %v1666
    %v2192 = vtanh.pop %v1474
    %v2193 = vtanh.pop %v1669
    %v2194 = vtanh.pop %v1477
    %v2195 = vtanh.pop %v1672
    %v2196 = vtanh.pop %v1480
    %v2197 = vtanh.pop %v1675
    %v2198 = vmul.f32 %v1916, %v1678
    %v2199 = vmul.f32 %v1931, %v1679
    %v2200 = vmul.f32 %v1946, %v1680
    %v2201 = vmul.f32 %v1961, %v1681
    %v2202 = vmul.f32 %v1976, %v1682
    %v2203 = vmul.f32 %v1991, %v1683
    %v2204 = vmul.f32 %v2006, %v1684
    %v2205 = vmul.f32 %v2021, %v1685
    %v2206 = vmul.f32 %v1748, %v2190
    %v2207 = vmul.f32 %v1763, %v2191
    %v2208 = vmul.f32 %v1778, %v2192
    %v2209 = vmul.f32 %v1793, %v2193
    %v2210 = vmul.f32 %v1808, %v2194
    %v2211 = vmul.f32 %v1823, %v2195
    %v2212 = vmul.f32 %v1838, %v2196
    %v2213 = vmul.f32 %v1853, %v2197
    %v2214 = vadd.f32 %v2198, %v2206
    %v2215 = vadd.f32 %v2199, %v2207
    %v2216 = vadd.f32 %v2200, %v2208
    %v2217 = vadd.f32 %v2201, %v2209
    %v2218 = vadd.f32 %v2202, %v2210
    %v2219 = vadd.f32 %v2203, %v2211
    %v2220 = vadd.f32 %v2204, %v2212
    %v2221 = vadd.f32 %v2205, %v2213
    %v2222 = vmul.f32 %v2084, %v2214
    %v2223 = vmul.f32 %v2099, %v2215
    %v2224 = vmul.f32 %v2114, %v2216
    %v2225 = vmul.f32 %v2129, %v2217
    %v2226 = vmul.f32 %v2144, %v2218
    %v2227 = vmul.f32 %v2159, %v2219
    %v2228 = vmul.f32 %v2174, %v2220
    %v2229 = vmul.f32 %v2189, %v2221
    %s2230 = scalar_lea.vmem [#allocation2], 64
    %2231 = vst [vmem:[%s2230] sm:$0xff] %v2084
    %2232 = vst [vmem:[%s2230 + $0x8] sm:$0xff] %v2099
    %2233 = vst [vmem:[%s2230 + $0x10] sm:$0xff] %v2114
    %2234 = vst [vmem:[%s2230 + $0x18] sm:$0xff] %v2129
    %2235 = vst [vmem:[%s2230 + $0x20] sm:$0xff] %v2144
    %2236 = vst [vmem:[%s2230 + $0x28] sm:$0xff] %v2159
    %2237 = vst [vmem:[%s2230 + $0x30] sm:$0xff] %v2174
    %2238 = vst [vmem:[%s2230 + $0x38] sm:$0xff] %v2189
    %s2239 = scalar_lea.vmem [#allocation4], 64
    %2240 = vst [vmem:[%s2239] sm:$0xff] %v2222
    %2241 = vst [vmem:[%s2239 + $0x8] sm:$0xff] %v2223
    %2242 = vst [vmem:[%s2239 + $0x10] sm:$0xff] %v2224
    %2243 = vst [vmem:[%s2239 + $0x18] sm:$0xff] %v2225
    %2244 = vst [vmem:[%s2239 + $0x20] sm:$0xff] %v2226
    %2245 = vst [vmem:[%s2239 + $0x28] sm:$0xff] %v2227
    %2246 = vst [vmem:[%s2239 + $0x30] sm:$0xff] %v2228
    %2247 = vst [vmem:[%s2239 + $0x38] sm:$0xff] %v2229
    %s2248 = scalar_lea.vmem [#allocation6], 64
    %2249 = vst [vmem:[%s2248] sm:$0xff] %v2214
    %2250 = vst [vmem:[%s2248 + $0x8] sm:$0xff] %v2215
    %2251 = vst [vmem:[%s2248 + $0x10] sm:$0xff] %v2216
    %2252 = vst [vmem:[%s2248 + $0x18] sm:$0xff] %v2217
    %2253 = vst [vmem:[%s2248 + $0x20] sm:$0xff] %v2218
    %2254 = vst [vmem:[%s2248 + $0x28] sm:$0xff] %v2219
    %2255 = vst [vmem:[%s2248 + $0x30] sm:$0xff] %v2220
    %2256 = vst [vmem:[%s2248 + $0x38] sm:$0xff] %v2221
    // Predicated region
    $region18: #{tpu_custom_call.1} parent=1 // pred_check
      _
    $region19: #{tpu_custom_call.1} parent=1 // pred_check_branch
      %2258 = sbr.rel (0) target = $region21
    $region20: #{tpu_custom_call.1} parent=1 // pred_region
      %2260 = vsyncadd [#allocation3], 0
      %s2261 = sshll.u32 [#allocation2], 4
      %s2262 = int_to_ptr.vmem [resolvable:$true] %s2261
      %s2263 = sshll.u32 %s4, 4
      %s2264 = int_to_ptr.hbm [resolvable:$true] %s2263
      %2269 = dma.vmem_to_hbm [thread:$0]  %s2262, 2048, %s2264, [#allocation3], 256, 256, 16
    $region21: #{tpu_custom_call.1} parent=1 // pred_fallthru
      _
    // Predicated region
    $region22: #{tpu_custom_call.1} parent=1 // pred_check
      _
    $region23: #{tpu_custom_call.1} parent=1 // pred_check_branch
      %2271 = sbr.rel (0) target = $region25
    $region24: #{tpu_custom_call.1} parent=1 // pred_region
      %2273 = vsyncadd [#allocation5], 0
      %s2274 = sshll.u32 [#allocation4], 4
      %s2275 = int_to_ptr.vmem [resolvable:$true] %s2274
      %s2276 = sshll.u32 %s5, 4
      %s2277 = int_to_ptr.hbm [resolvable:$true] %s2276
      %2282 = dma.vmem_to_hbm [thread:$0]  %s2275, 2048, %s2277, [#allocation5], 256, 256, 16
    $region25: #{tpu_custom_call.1} parent=1 // pred_fallthru
      _
    // Predicated region
    $region26: #{tpu_custom_call.1} parent=1 // pred_check
      _
    $region27: #{tpu_custom_call.1} parent=1 // pred_check_branch
      %2284 = sbr.rel (0) target = $region29
    $region28: #{tpu_custom_call.1} parent=1 // pred_region
      %2286 = vsyncadd [#allocation5], 0
      %s2287 = sshll.u32 [#allocation6], 4
      %s2288 = int_to_ptr.vmem [resolvable:$true] %s2287
      %s2289 = sshll.u32 %s6, 4
      %s2290 = int_to_ptr.hbm [resolvable:$true] %s2289
      %2295 = dma.vmem_to_hbm [thread:$0]  %s2288, 2048, %s2290, [#allocation5], 256, 256, 16
    $region29: #{tpu_custom_call.1} parent=1 // pred_fallthru
      _
    // Predicated region
    $region30: #{tpu_custom_call.1} parent=1 // pred_check
      _
    $region31: #{tpu_custom_call.1} parent=1 // pred_check_branch
      %2297 = sbr.rel (0) target = $region33
    $region32: #{tpu_custom_call.1} parent=1 // pred_region
      %2299 = dma.done [#allocation3], 2048
    $region33: #{tpu_custom_call.1} parent=1 // pred_fallthru
      _
    // Predicated region
    $region34: #{tpu_custom_call.1} parent=1 // pred_check
      _
    $region35: #{tpu_custom_call.1} parent=1 // pred_check_branch
      %2301 = sbr.rel (0) target = $region37
    $region36: #{tpu_custom_call.1} parent=1 // pred_region
      %2303 = dma.done [#allocation5], 2048
    $region37: #{tpu_custom_call.1} parent=1 // pred_fallthru
      _
    // Predicated region
    $region38: #{tpu_custom_call.1} parent=1 // pred_check
      _
    $region39: #{tpu_custom_call.1} parent=1 // pred_check_branch
      %2305 = sbr.rel (0) target = $region41
    $region40: #{tpu_custom_call.1} parent=1 // pred_region
      %2307 = dma.done [#allocation5], 2048
    $region41: #{tpu_custom_call.1} parent=1 // pred_fallthru
      _
    %2308 = vsyncpa [#allocation3], 1
    %2309 = vsyncpa [#allocation5], 1

</llo_original>
